<compile_context>
chip_gen: v5e
topology: v5e:2x2
jax: 0.10.0
libtpu: 0.0.40
codegen_flags: <defaults>
</compile_context>

<pallas_src>
import functools

import jax
import jax.numpy as jnp
from jax.experimental import pallas as pl
from jax.experimental.pallas import tpu as pltpu


# ----------------------------------------------------------------------------
# SimpleHashEncoding (Instant-NGP style): L levels x F features = 32 dims.
# ----------------------------------------------------------------------------
NUM_LEVELS = 16
FEATS_PER_LEVEL = 2
TABLE_SIZE = 1 << 12           # small hash table (2^12 entries per level)
BASE_RES = 16
PER_LEVEL_SCALE = 1.381912879967776   # ~ exp((ln(512) - ln(16)) / (16 - 1))

_PRIMES = jnp.array([1, 2654435761, 805459861], dtype=jnp.uint32)
_RESOLUTIONS = jnp.array(
    [int(BASE_RES * (PER_LEVEL_SCALE ** lvl)) for lvl in range(NUM_LEVELS)],
    dtype=jnp.float32)


def hash_encode(x, tables):
    """x: (N, 3) in [0, 1].  tables: (L, T, F).  Returns (L*F, N) float32.

    Lane-dense layout: every per-point op works on (L, N) arrays (points on
    the 128-wide lane axis) and the result comes out directly in the
    transposed (32, N) layout consumed by the Pallas MLP kernel — the old
    (L, N, 3)/(L, N, 2) trailing dims and the final transpose(1,0,2) relayout
    are gone.
    """
    n = x.shape[0]
    res = _RESOLUTIONS[:, None]                                   # (L, 1)
    xs = [x[:, d][None, :] * res for d in range(3)]               # 3 x (L, N)
    x0 = [jnp.floor(c).astype(jnp.int32) for c in xs]             # 3 x (L, N)
    fr = [c - i.astype(jnp.float32) for c, i in zip(xs, x0)]      # 3 x (L, N)

    # Per-feature flat tables: one-time (L*T,) copies of a 512 KiB table.
    t_flat = [tables[..., f].reshape(NUM_LEVELS * TABLE_SIZE)
              for f in range(FEATS_PER_LEVEL)]
    level_off = (jnp.arange(NUM_LEVELS, dtype=jnp.int32) * TABLE_SIZE)[:, None]

    feats = [jnp.zeros((NUM_LEVELS, n), jnp.float32)
             for _ in range(FEATS_PER_LEVEL)]
    # TODO(synk): like the reference 'Simple' encoder this always hashes (even
    # coarse levels) and points at x == 1.0 hash the (res+1) corner.
    for corner in range(8):
        offs = [(corner >> d) & 1 for d in range(3)]
        h = jnp.uint32(0)
        w = jnp.ones((NUM_LEVELS, n), jnp.float32)
        for d in range(3):
            idx_d = (x0[d] + offs[d]).astype(jnp.uint32)          # (L, N)
            h = h ^ (idx_d * _PRIMES[d])
            w = w * (fr[d] if offs[d] == 1 else (1.0 - fr[d]))
        g = level_off + (h % jnp.uint32(TABLE_SIZE)).astype(jnp.int32)  # (L, N)
        for f in range(FEATS_PER_LEVEL):
            feats[f] = feats[f] + w * jnp.take(t_flat[f], g, axis=0)

    # (L, N) per feature -> (L, F, N) -> (L*F, N); row 2l+f = level l feat f,
    # matching the reference's per-level concat order.  Leading-dim reshape
    # only — no relayout.
    return jnp.stack(feats, axis=1).reshape(NUM_LEVELS * FEATS_PER_LEVEL, n)


# ----------------------------------------------------------------------------
# SimpleMLP(32 -> 128 x 3 hidden -> 4), ReLU between layers, one Pallas kernel
# (all matmuls fused, weights resident in VMEM, transposed point-on-lane
# layout so the tiny 4-wide output stays lane-dense).
# ----------------------------------------------------------------------------
OUT_PAD = 8   # last-layer rows (4 real outputs + 4 zero pad -> sublane aligned)


def mlp_kernel(x_ref,
               w1_ref, b1_ref, w2_ref, b2_ref, w3_ref, b3_ref,
               w4_ref, b4_ref, w5_ref, b5_ref,
               o_ref):
    # Transposed layout: x (32, tile_m) bf16, wK (d_out, d_in) bf16,
    # bK (d_out, 1) f32.  bf16 matmul operands, f32 accumulation; bias-add and
    # ReLU in f32 (friendly to v5e's f32-only VPU).
    h = jnp.dot(w1_ref[...], x_ref[...],
                preferred_element_type=jnp.float32) + b1_ref[...]
    h = jnp.maximum(h, 0.0).astype(jnp.bfloat16)
    h = jnp.dot(w2_ref[...], h,
                preferred_element_type=jnp.float32) + b2_ref[...]
    h = jnp.maximum(h, 0.0).astype(jnp.bfloat16)
    h = jnp.dot(w3_ref[...], h,
                preferred_element_type=jnp.float32) + b3_ref[...]
    h = jnp.maximum(h, 0.0).astype(jnp.bfloat16)
    h = jnp.dot(w4_ref[...], h,
                preferred_element_type=jnp.float32) + b4_ref[...]
    h = jnp.maximum(h, 0.0).astype(jnp.bfloat16)
    out = jnp.dot(w5_ref[...], h,
                  preferred_element_type=jnp.float32) + b5_ref[...]
    o_ref[...] = out.astype(o_ref.dtype)           # (8, tile_m) lane-dense vst


_PARAM_ORDER = ("w1", "b1", "w2", "b2", "w3", "b3", "w4", "b4", "w5", "b5")


def prepare_mlp_params(params):
    """Transpose to (d_out, d_in), cast weights bf16 / biases f32, pad layer 5
    to 8 output rows.  Call ONCE outside the jitted forward."""
    prepped = {}
    for li in range(1, 6):
        w = params[f"w{li}"].T            # (d_out, d_in)
        b = params[f"b{li}"].T            # (d_out, 1)
        if li == 5:
            w = jnp.pad(w, ((0, OUT_PAD - w.shape[0]), (0, 0)))
            b = jnp.pad(b, ((0, OUT_PAD - b.shape[0]), (0, 0)))
        # TODO(synk): bf16 weights/encoding give ~3 significant digits vs the
        # f32 PyTorch reference; keep f32 here if bit-tight matching is needed.
        prepped[f"w{li}"] = w.astype(jnp.bfloat16)
        prepped[f"b{li}"] = b.astype(jnp.float32)
    return prepped


def mlp_pallas(encT, prepped, *, out_dim=4, tile_m=1024):
    """encT: (32, N) bf16 (points on lanes) -> (N, out_dim) float32."""
    in_dim, n = encT.shape
    n_pad = pl.cdiv(n, tile_m) * tile_m
    if n_pad != n:
        encT = jnp.pad(encT, ((0, 0), (0, n_pad - n)))
    grid = n_pad // tile_m

    # x tile is pipelined; constant weights/biases live whole-array in VMEM.
    resident = pl.BlockSpec(memory_space=pltpu.MemorySpace.VMEM)
    in_specs = [pl.BlockSpec((in_dim, tile_m), lambda i: (0, i))]
    flat_params = []
    for k in _PARAM_ORDER:
        in_specs.append(resident)
        flat_params.append(prepped[k])

    # Advisory cost estimate so XLA schedules the surrounding gather chain.
    flops = 0
    param_bytes = 0
    for k in _PARAM_ORDER:
        p = prepped[k]
        param_bytes += p.size * p.dtype.itemsize
        if k.startswith("w"):
            flops += 2 * n_pad * p.shape[0] * p.shape[1]
    bytes_accessed = (n_pad * in_dim * encT.dtype.itemsize
                      + n_pad * OUT_PAD * 4 + param_bytes)

    out = pl.pallas_call(
        mlp_kernel,
        out_shape=jax.ShapeDtypeStruct((OUT_PAD, n_pad), jnp.float32),
        grid_spec=pltpu.PrefetchScalarGridSpec(
            num_scalar_prefetch=0,
            grid=(grid,),
            in_specs=in_specs,
            out_specs=pl.BlockSpec((OUT_PAD, tile_m), lambda i: (0, i)),
        ),
        compiler_params=pltpu.CompilerParams(
            dimension_semantics=("parallel",),
            # Footprint is only a few MiB at tile_m=1024; give headroom for
            # very large tiles (v5e scoped default is 16 MiB, v7x 32 MiB).
            vmem_limit_bytes=(64 * 1024 * 1024 if tile_m > 2048 else None)),
        cost_estimate=pl.CostEstimate(
            flops=flops, transcendentals=0, bytes_accessed=bytes_accessed),
    )(encT, *flat_params)
    # Slice off padded rows/points; tiny (out_dim, N) -> (N, out_dim) transpose.
    return out[:out_dim, :n].T


# ----------------------------------------------------------------------------
# Parameter init (deterministic, in-script) and end-to-end forward.
# ----------------------------------------------------------------------------
def init_params(key, hidden_dim=128, num_layers=5, include_rgb=True):
    out_dim = 4 if include_rgb else 1
    in_dim = NUM_LEVELS * FEATS_PER_LEVEL  # 32
    dims = [in_dim] + [hidden_dim] * (num_layers - 1) + [out_dim]
    assert num_layers == 5, "kernel is specialized for 5 linear layers"

    keys = jax.random.split(key, 2 * num_layers + 1)
    params = {}
    for li in range(num_layers):
        fan_in = dims[li]
        w = jax.random.normal(keys[2 * li], (dims[li], dims[li + 1]),
                              jnp.float32) * (1.0 / jnp.sqrt(fan_in))
        b = jnp.zeros((1, dims[li + 1]), jnp.float32)
        params[f"w{li + 1}"] = w
        params[f"b{li + 1}"] = b

    # Hash tables: uniform in [-1e-4, 1e-4] like Instant-NGP.
    tables = jax.random.uniform(
        keys[-1], (NUM_LEVELS, TABLE_SIZE, FEATS_PER_LEVEL),
        jnp.float32, minval=-1e-4, maxval=1e-4)
    return params, tables


@functools.partial(jax.jit, static_argnames=("tile_m", "out_dim"))
def hashencoding_sdf_forward(x, prepped, tables, *, tile_m=1024, out_dim=4):
    # Encoding produced transposed (32, N) and cast to bf16: halves the HBM
    # traffic feeding the bf16-matmul kernel and matches its layout exactly.
    encT = hash_encode(x, tables).astype(jnp.bfloat16)        # (32, N)
    return mlp_pallas(encT, prepped, out_dim=out_dim, tile_m=tile_m)  # (N, 4)


if __name__ == "__main__":
    key = jax.random.PRNGKey(0)
    k_x, k_p = jax.random.split(key)

    N = 1000                                                  # exercises padding
    x = jax.random.uniform(k_x, (N, 3), jnp.float32)          # points in [0,1]^3
    params, tables = init_params(k_p, hidden_dim=128, num_layers=5,
                                 include_rgb=True)

    # Weight prep (transpose / cast / pad) hoisted out of the jitted forward:
    # done once, reused for every call.
    prepped = prepare_mlp_params(params)

    # tile_m=512 -> n_pad=1024, grid=2: >=2 'parallel' steps so both v7x
    # TensorCores get work; for large N raise tile_m to 1024-4096.
    out = hashencoding_sdf_forward(x, prepped, tables, tile_m=512, out_dim=4)
    jax.block_until_ready(out)

    assert out.shape == (N, 4) and out.dtype == jnp.float32
    assert bool(jnp.all(jnp.isfinite(out)))
    print("KERNEL_OK")
</pallas_src>

<mosaic_0001>
module attributes {stable_mosaic.version = 11 : i64} {
  func.func @mlp_kernel(%arg0: i32, %arg1: memref<32x512xbf16, #tpu.memory_space<vmem>>, %arg2: memref<128x32xbf16, #tpu.memory_space<vmem>>, %arg3: memref<128x1xf32, #tpu.memory_space<vmem>>, %arg4: memref<128x128xbf16, #tpu.memory_space<vmem>>, %arg5: memref<128x1xf32, #tpu.memory_space<vmem>>, %arg6: memref<128x128xbf16, #tpu.memory_space<vmem>>, %arg7: memref<128x1xf32, #tpu.memory_space<vmem>>, %arg8: memref<128x128xbf16, #tpu.memory_space<vmem>>, %arg9: memref<128x1xf32, #tpu.memory_space<vmem>>, %arg10: memref<8x128xbf16, #tpu.memory_space<vmem>>, %arg11: memref<8x1xf32, #tpu.memory_space<vmem>>, %arg12: memref<8x512xf32, #tpu.memory_space<vmem>>) attributes {dimension_semantics = [#tpu.dimension_semantics<parallel>], iteration_bounds = array<i64: 2>, scalar_prefetch = 0 : i64, scratch_operands = 0 : i64, tpu.core_type = #tpu.core_type<tc>, window_params = [{transform_indices = @transform_0, window_bounds = array<i64: 32, 512>}, {pipeline_mode = #tpu.pipeline_mode<synchronous>, transform_indices = @transform_1, window_bounds = array<i64: 128, 32>}, {pipeline_mode = #tpu.pipeline_mode<synchronous>, transform_indices = @transform_2, window_bounds = array<i64: 128, 1>}, {pipeline_mode = #tpu.pipeline_mode<synchronous>, transform_indices = @transform_3, window_bounds = array<i64: 128, 128>}, {pipeline_mode = #tpu.pipeline_mode<synchronous>, transform_indices = @transform_4, window_bounds = array<i64: 128, 1>}, {pipeline_mode = #tpu.pipeline_mode<synchronous>, transform_indices = @transform_5, window_bounds = array<i64: 128, 128>}, {pipeline_mode = #tpu.pipeline_mode<synchronous>, transform_indices = @transform_6, window_bounds = array<i64: 128, 1>}, {pipeline_mode = #tpu.pipeline_mode<synchronous>, transform_indices = @transform_7, window_bounds = array<i64: 128, 128>}, {pipeline_mode = #tpu.pipeline_mode<synchronous>, transform_indices = @transform_8, window_bounds = array<i64: 128, 1>}, {pipeline_mode = #tpu.pipeline_mode<synchronous>, transform_indices = @transform_9, window_bounds = array<i64: 8, 128>}, {pipeline_mode = #tpu.pipeline_mode<synchronous>, transform_indices = @transform_10, window_bounds = array<i64: 8, 1>}, {transform_indices = @transform_11, window_bounds = array<i64: 8, 512>}]} {
    %c0 = arith.constant 0 : index
    %c0_0 = arith.constant 0 : index
    %0 = vector.load %arg2[%c0, %c0_0] : memref<128x32xbf16, #tpu.memory_space<vmem>>, vector<128x32xbf16>
    %c0_1 = arith.constant 0 : index
    %c0_2 = arith.constant 0 : index
    %1 = vector.load %arg1[%c0_1, %c0_2] : memref<32x512xbf16, #tpu.memory_space<vmem>>, vector<32x512xbf16>
    %cst = arith.constant dense<0.000000e+00> : vector<128x512xf32>
    %2 = tpu.matmul %0, %1, %cst {dimension_numbers = #tpu.dot_dimension_numbers<[1], [0], [0], [1], [0, 0, 1, 1], [], []>} : vector<128x32xbf16>, vector<32x512xbf16>, vector<128x512xf32> -> vector<128x512xf32>
    %c0_3 = arith.constant 0 : index
    %c0_4 = arith.constant 0 : index
    %3 = vector.load %arg3[%c0_3, %c0_4] : memref<128x1xf32, #tpu.memory_space<vmem>>, vector<128x1xf32>
    %4 = vector.broadcast %3 : vector<128x1xf32> to vector<128x512xf32>
    %5 = arith.addf %2, %4 : vector<128x512xf32>
    %cst_5 = arith.constant 0.000000e+00 : f32
    %6 = vector.broadcast %cst_5 : f32 to vector<128x512xf32>
    %7 = arith.maximumf %5, %6 : vector<128x512xf32>
    %8 = arith.truncf %7 : vector<128x512xf32> to vector<128x512xbf16>
    %c0_6 = arith.constant 0 : index
    %c0_7 = arith.constant 0 : index
    %9 = vector.load %arg4[%c0_6, %c0_7] : memref<128x128xbf16, #tpu.memory_space<vmem>>, vector<128x128xbf16>
    %cst_8 = arith.constant dense<0.000000e+00> : vector<128x512xf32>
    %10 = tpu.matmul %9, %8, %cst_8 {dimension_numbers = #tpu.dot_dimension_numbers<[1], [0], [0], [1], [0, 0, 1, 1], [], []>} : vector<128x128xbf16>, vector<128x512xbf16>, vector<128x512xf32> -> vector<128x512xf32>
    %c0_9 = arith.constant 0 : index
    %c0_10 = arith.constant 0 : index
    %11 = vector.load %arg5[%c0_9, %c0_10] : memref<128x1xf32, #tpu.memory_space<vmem>>, vector<128x1xf32>
    %12 = vector.broadcast %11 : vector<128x1xf32> to vector<128x512xf32>
    %13 = arith.addf %10, %12 : vector<128x512xf32>
    %cst_11 = arith.constant 0.000000e+00 : f32
    %14 = vector.broadcast %cst_11 : f32 to vector<128x512xf32>
    %15 = arith.maximumf %13, %14 : vector<128x512xf32>
    %16 = arith.truncf %15 : vector<128x512xf32> to vector<128x512xbf16>
    %c0_12 = arith.constant 0 : index
    %c0_13 = arith.constant 0 : index
    %17 = vector.load %arg6[%c0_12, %c0_13] : memref<128x128xbf16, #tpu.memory_space<vmem>>, vector<128x128xbf16>
    %cst_14 = arith.constant dense<0.000000e+00> : vector<128x512xf32>
    %18 = tpu.matmul %17, %16, %cst_14 {dimension_numbers = #tpu.dot_dimension_numbers<[1], [0], [0], [1], [0, 0, 1, 1], [], []>} : vector<128x128xbf16>, vector<128x512xbf16>, vector<128x512xf32> -> vector<128x512xf32>
    %c0_15 = arith.constant 0 : index
    %c0_16 = arith.constant 0 : index
    %19 = vector.load %arg7[%c0_15, %c0_16] : memref<128x1xf32, #tpu.memory_space<vmem>>, vector<128x1xf32>
    %20 = vector.broadcast %19 : vector<128x1xf32> to vector<128x512xf32>
    %21 = arith.addf %18, %20 : vector<128x512xf32>
    %cst_17 = arith.constant 0.000000e+00 : f32
    %22 = vector.broadcast %cst_17 : f32 to vector<128x512xf32>
    %23 = arith.maximumf %21, %22 : vector<128x512xf32>
    %24 = arith.truncf %23 : vector<128x512xf32> to vector<128x512xbf16>
    %c0_18 = arith.constant 0 : index
    %c0_19 = arith.constant 0 : index
    %25 = vector.load %arg8[%c0_18, %c0_19] : memref<128x128xbf16, #tpu.memory_space<vmem>>, vector<128x128xbf16>
    %cst_20 = arith.constant dense<0.000000e+00> : vector<128x512xf32>
    %26 = tpu.matmul %25, %24, %cst_20 {dimension_numbers = #tpu.dot_dimension_numbers<[1], [0], [0], [1], [0, 0, 1, 1], [], []>} : vector<128x128xbf16>, vector<128x512xbf16>, vector<128x512xf32> -> vector<128x512xf32>
    %c0_21 = arith.constant 0 : index
    %c0_22 = arith.constant 0 : index
    %27 = vector.load %arg9[%c0_21, %c0_22] : memref<128x1xf32, #tpu.memory_space<vmem>>, vector<128x1xf32>
    %28 = vector.broadcast %27 : vector<128x1xf32> to vector<128x512xf32>
    %29 = arith.addf %26, %28 : vector<128x512xf32>
    %cst_23 = arith.constant 0.000000e+00 : f32
    %30 = vector.broadcast %cst_23 : f32 to vector<128x512xf32>
    %31 = arith.maximumf %29, %30 : vector<128x512xf32>
    %32 = arith.truncf %31 : vector<128x512xf32> to vector<128x512xbf16>
    %c0_24 = arith.constant 0 : index
    %c0_25 = arith.constant 0 : index
    %33 = vector.load %arg10[%c0_24, %c0_25] : memref<8x128xbf16, #tpu.memory_space<vmem>>, vector<8x128xbf16>
    %cst_26 = arith.constant dense<0.000000e+00> : vector<8x512xf32>
    %34 = tpu.matmul %33, %32, %cst_26 {dimension_numbers = #tpu.dot_dimension_numbers<[1], [0], [0], [1], [0, 0, 1, 1], [], []>} : vector<8x128xbf16>, vector<128x512xbf16>, vector<8x512xf32> -> vector<8x512xf32>
    %c0_27 = arith.constant 0 : index
    %c0_28 = arith.constant 0 : index
    %35 = vector.load %arg11[%c0_27, %c0_28] : memref<8x1xf32, #tpu.memory_space<vmem>>, vector<8x1xf32>
    %36 = vector.broadcast %35 : vector<8x1xf32> to vector<8x512xf32>
    %37 = arith.addf %34, %36 : vector<8x512xf32>
    %c0_29 = arith.constant 0 : index
    %c0_30 = arith.constant 0 : index
    %38 = vector.load %arg12[%c0_29, %c0_30] : memref<8x512xf32, #tpu.memory_space<vmem>>, vector<8x512xf32>
    tpu.vector_store %arg12[%c0_29, %c0_30], %37 {strides = array<i32>} : memref<8x512xf32, #tpu.memory_space<vmem>>, vector<8x512xf32>,
    return
  }
  func.func @transform_0(%arg0: i32) -> (i32, i32) {
    %c0_i32 = arith.constant 0 : i32
    %c0_i32_0 = arith.constant 0 : i32
    return %c0_i32, %arg0 : i32, i32
  }
  func.func @transform_1(%arg0: i32) -> (i32, i32) {
    %c0_i32 = arith.constant 0 : i32
    %c0_i32_0 = arith.constant 0 : i32
    %c0_i32_1 = arith.constant 0 : i32
    return %c0_i32, %c0_i32_0 : i32, i32
  }
  func.func @transform_2(%arg0: i32) -> (i32, i32) {
    %c0_i32 = arith.constant 0 : i32
    %c0_i32_0 = arith.constant 0 : i32
    %c0_i32_1 = arith.constant 0 : i32
    return %c0_i32, %c0_i32_0 : i32, i32
  }
  func.func @transform_3(%arg0: i32) -> (i32, i32) {
    %c0_i32 = arith.constant 0 : i32
    %c0_i32_0 = arith.constant 0 : i32
    %c0_i32_1 = arith.constant 0 : i32
    return %c0_i32, %c0_i32_0 : i32, i32
  }
  func.func @transform_4(%arg0: i32) -> (i32, i32) {
    %c0_i32 = arith.constant 0 : i32
    %c0_i32_0 = arith.constant 0 : i32
    %c0_i32_1 = arith.constant 0 : i32
    return %c0_i32, %c0_i32_0 : i32, i32
  }
  func.func @transform_5(%arg0: i32) -> (i32, i32) {
    %c0_i32 = arith.constant 0 : i32
    %c0_i32_0 = arith.constant 0 : i32
    %c0_i32_1 = arith.constant 0 : i32
    return %c0_i32, %c0_i32_0 : i32, i32
  }
  func.func @transform_6(%arg0: i32) -> (i32, i32) {
    %c0_i32 = arith.constant 0 : i32
    %c0_i32_0 = arith.constant 0 : i32
    %c0_i32_1 = arith.constant 0 : i32
    return %c0_i32, %c0_i32_0 : i32, i32
  }
  func.func @transform_7(%arg0: i32) -> (i32, i32) {
    %c0_i32 = arith.constant 0 : i32
    %c0_i32_0 = arith.constant 0 : i32
    %c0_i32_1 = arith.constant 0 : i32
    return %c0_i32, %c0_i32_0 : i32, i32
  }
  func.func @transform_8(%arg0: i32) -> (i32, i32) {
    %c0_i32 = arith.constant 0 : i32
    %c0_i32_0 = arith.constant 0 : i32
    %c0_i32_1 = arith.constant 0 : i32
    return %c0_i32, %c0_i32_0 : i32, i32
  }
  func.func @transform_9(%arg0: i32) -> (i32, i32) {
    %c0_i32 = arith.constant 0 : i32
    %c0_i32_0 = arith.constant 0 : i32
    %c0_i32_1 = arith.constant 0 : i32
    return %c0_i32, %c0_i32_0 : i32, i32
  }
  func.func @transform_10(%arg0: i32) -> (i32, i32) {
    %c0_i32 = arith.constant 0 : i32
    %c0_i32_0 = arith.constant 0 : i32
    %c0_i32_1 = arith.constant 0 : i32
    return %c0_i32, %c0_i32_0 : i32, i32
  }
  func.func @transform_11(%arg0: i32) -> (i32, i32) {
    %c0_i32 = arith.constant 0 : i32
    %c0_i32_0 = arith.constant 0 : i32
    return %c0_i32, %arg0 : i32, i32
  }
}

</mosaic_0001>

<llo_original>
// kernel: hashencoding_sdf_forward.1
$region0: #{hashencoding_sdf_forward.1}
  #allocation0 [shape = 'u32[]', space=smem, size = 0x4, offset = 0x4, fixed_abs, tag = 'smem constant byte address 0x4 - core index']
  #allocation1 [shape = 'u32[72,128]{1,0:T(1,128)}', space=vmem, size = 0x9000, scoped, tag = 'internal scratch']
  %s0 = inlined_call_operand.vmem [shape: bf16[32,1024], index: 0, kind: input, shape index: {}]
  %s1 = inlined_call_operand.vmem [shape: bf16[128,32], index: 1, kind: input, shape index: {}]
  %s2 = inlined_call_operand.vmem [shape: f32[128,1], index: 2, kind: input, shape index: {}]
  %s3 = inlined_call_operand.vmem [shape: bf16[128,128], index: 3, kind: input, shape index: {}]
  %s4 = inlined_call_operand.vmem [shape: f32[128,1], index: 4, kind: input, shape index: {}]
  %s5 = inlined_call_operand.vmem [shape: bf16[128,128], index: 5, kind: input, shape index: {}]
  %s6 = inlined_call_operand.vmem [shape: f32[128,1], index: 6, kind: input, shape index: {}]
  %s7 = inlined_call_operand.vmem [shape: bf16[128,128], index: 7, kind: input, shape index: {}]
  %s8 = inlined_call_operand.vmem [shape: f32[128,1], index: 8, kind: input, shape index: {}]
  %s9 = inlined_call_operand.vmem [shape: bf16[8,128], index: 9, kind: input, shape index: {}]
  %s10 = inlined_call_operand.vmem [shape: f32[8,1], index: 10, kind: input, shape index: {}]
  %s11 = inlined_call_operand.vmem [shape: f32[8,1024], index: 11, kind: output, shape index: {}]
  %s12 = sld [smem:[#allocation0]]
  $region100: #{hashencoding_sdf_forward.1} parent=0
    _
  %s14 = ssub.s32 1, %s12
  %s15 = scalar_select 0, %s14, %s12
  $region1: #{hashencoding_sdf_forward.1} parent=0
    #allocation2 [shape = 'u8[65536]{0}', space=vmem, size = 0x10000, scoped, tag = 'input window, operand 0']
    loop: start=0, step=1, limit=4
    $region2: #{hashencoding_sdf_forward.1} parent=1 // loop_pre_header
      _
    $region3: #{hashencoding_sdf_forward.1} parent=1 // loop_header
      %s17 = sphi 0, %s21
      %p18 = scmp.ge.s32.totalorder %s17, 4
      %s27 = sphi 0, %s29
      %s30 = sphi 0, %s27
      %s31 = sphi 0, %s30
      %s47 = sphi 0, %s31
      %s51 = sphi 0, %s51
      %s53 = sphi 0, %s51
      %s54 = sphi 0, %s53
      %s68 = sphi 0, %s54
      %s72 = sphi 0, %s72
      %s74 = sphi 0, %s72
      %s75 = sphi 0, %s74
      %s89 = sphi 0, %s75
      %s93 = sphi 0, %s93
      %s95 = sphi 0, %s93
      %s96 = sphi 0, %s95
      %s110 = sphi 0, %s96
      %s114 = sphi 0, %s114
      %s116 = sphi 0, %s114
      %s117 = sphi 0, %s116
      %s131 = sphi 0, %s117
      %s135 = sphi 0, %s135
      %s137 = sphi 0, %s135
      %s138 = sphi 0, %s137
      %s152 = sphi 0, %s138
      %s156 = sphi 0, %s156
      %s158 = sphi 0, %s156
      %s159 = sphi 0, %s158
      %s173 = sphi 0, %s159
      %s177 = sphi 0, %s177
      %s179 = sphi 0, %s177
      %s180 = sphi 0, %s179
      %s194 = sphi 0, %s180
      %s198 = sphi 0, %s198
      %s200 = sphi 0, %s198
      %s201 = sphi 0, %s200
      %s215 = sphi 0, %s201
      %s219 = sphi 0, %s219
      %s221 = sphi 0, %s219
      %s222 = sphi 0, %s221
      %s236 = sphi 0, %s222
      %s240 = sphi 0, %s240
      %s242 = sphi 0, %s240
      %s243 = sphi 0, %s242
      %s257 = sphi 0, %s243
      %s263 = sphi 0, %s265
      %s266 = sphi 0, %s263
      %s267 = sphi 0, %s266
      %s283 = sphi 0, %s267
    $region4: #{hashencoding_sdf_forward.1} parent=1 // loop_header_branch
      %20 = sbr.rel (%p18) target = $region8
    $region5: #{hashencoding_sdf_forward.1} parent=1 // loop_body
      %s22 = ssub.s32 %s17, 1
      %s23 = ssub.s32 %s17, 2
      %s24 = sadd.s32 %s17, 1
      %s25 = ssub.s32 %s17, %s24
      %p26 = scmp.eq.s32.totalorder %s25, 0
      %s28 = sadd.s32 %s27, 1
      %s29 = scalar_select %p26, %s27, %s28
      %p32 = pneg %p26
      %p33 = scmp.eq.s32.totalorder %s17, 1
      %p34 = por %p32, %p33
      %p35 = scmp.ne.s32.totalorder %s27, %s30
      %p36 = scmp.eq.s32.totalorder %s17, 0
      %p37 = por %p35, %p36
      %p38 = scmp.ne.s32.totalorder %s27, %s30
      %p39 = scmp.eq.s32.totalorder %s22, 1
      %p40 = por %p38, %p39
      %p41 = scmp.ne.s32.totalorder %s30, %s31
      %p42 = scmp.eq.s32.totalorder %s22, 0
      %p43 = por %p41, %p42
      %p44 = scmp.ne.s32.totalorder %s30, %s31
      %p45 = scmp.eq.s32.totalorder %s23, 1
      %p46 = por %p44, %p45
      %p48 = scmp.ne.s32.totalorder %s31, %s47
      %p49 = scmp.eq.s32.totalorder %s23, 0
      %p50 = por %p48, %p49
      %s52 = sadd.s32 %s51, 1
      %p55 = scmp.eq.s32.totalorder %s17, 1
      %p56 = scmp.ne.s32.totalorder %s51, %s53
      %p57 = scmp.eq.s32.totalorder %s17, 0
      %p58 = por %p56, %p57
      %p59 = scmp.ne.s32.totalorder %s51, %s53
      %p60 = scmp.eq.s32.totalorder %s22, 1
      %p61 = por %p59, %p60
      %p62 = scmp.ne.s32.totalorder %s53, %s54
      %p63 = scmp.eq.s32.totalorder %s22, 0
      %p64 = por %p62, %p63
      %p65 = scmp.ne.s32.totalorder %s53, %s54
      %p66 = scmp.eq.s32.totalorder %s23, 1
      %p67 = por %p65, %p66
      %p69 = scmp.ne.s32.totalorder %s54, %s68
      %p70 = scmp.eq.s32.totalorder %s23, 0
      %p71 = por %p69, %p70
      %s73 = sadd.s32 %s72, 1
      %p76 = scmp.eq.s32.totalorder %s17, 1
      %p77 = scmp.ne.s32.totalorder %s72, %s74
      %p78 = scmp.eq.s32.totalorder %s17, 0
      %p79 = por %p77, %p78
      %p80 = scmp.ne.s32.totalorder %s72, %s74
      %p81 = scmp.eq.s32.totalorder %s22, 1
      %p82 = por %p80, %p81
      %p83 = scmp.ne.s32.totalorder %s74, %s75
      %p84 = scmp.eq.s32.totalorder %s22, 0
      %p85 = por %p83, %p84
      %p86 = scmp.ne.s32.totalorder %s74, %s75
      %p87 = scmp.eq.s32.totalorder %s23, 1
      %p88 = por %p86, %p87
      %p90 = scmp.ne.s32.totalorder %s75, %s89
      %p91 = scmp.eq.s32.totalorder %s23, 0
      %p92 = por %p90, %p91
      %s94 = sadd.s32 %s93, 1
      %p97 = scmp.eq.s32.totalorder %s17, 1
      %p98 = scmp.ne.s32.totalorder %s93, %s95
      %p99 = scmp.eq.s32.totalorder %s17, 0
      %p100 = por %p98, %p99
      %p101 = scmp.ne.s32.totalorder %s93, %s95
      %p102 = scmp.eq.s32.totalorder %s22, 1
      %p103 = por %p101, %p102
      %p104 = scmp.ne.s32.totalorder %s95, %s96
      %p105 = scmp.eq.s32.totalorder %s22, 0
      %p106 = por %p104, %p105
      %p107 = scmp.ne.s32.totalorder %s95, %s96
      %p108 = scmp.eq.s32.totalorder %s23, 1
      %p109 = por %p107, %p108
      %p111 = scmp.ne.s32.totalorder %s96, %s110
      %p112 = scmp.eq.s32.totalorder %s23, 0
      %p113 = por %p111, %p112
      %s115 = sadd.s32 %s114, 1
      %p118 = scmp.eq.s32.totalorder %s17, 1
      %p119 = scmp.ne.s32.totalorder %s114, %s116
      %p120 = scmp.eq.s32.totalorder %s17, 0
      %p121 = por %p119, %p120
      %p122 = scmp.ne.s32.totalorder %s114, %s116
      %p123 = scmp.eq.s32.totalorder %s22, 1
      %p124 = por %p122, %p123
      %p125 = scmp.ne.s32.totalorder %s116, %s117
      %p126 = scmp.eq.s32.totalorder %s22, 0
      %p127 = por %p125, %p126
      %p128 = scmp.ne.s32.totalorder %s116, %s117
      %p129 = scmp.eq.s32.totalorder %s23, 1
      %p130 = por %p128, %p129
      %p132 = scmp.ne.s32.totalorder %s117, %s131
      %p133 = scmp.eq.s32.totalorder %s23, 0
      %p134 = por %p132, %p133
      %s136 = sadd.s32 %s135, 1
      %p139 = scmp.eq.s32.totalorder %s17, 1
      %p140 = scmp.ne.s32.totalorder %s135, %s137
      %p141 = scmp.eq.s32.totalorder %s17, 0
      %p142 = por %p140, %p141
      %p143 = scmp.ne.s32.totalorder %s135, %s137
      %p144 = scmp.eq.s32.totalorder %s22, 1
      %p145 = por %p143, %p144
      %p146 = scmp.ne.s32.totalorder %s137, %s138
      %p147 = scmp.eq.s32.totalorder %s22, 0
      %p148 = por %p146, %p147
      %p149 = scmp.ne.s32.totalorder %s137, %s138
      %p150 = scmp.eq.s32.totalorder %s23, 1
      %p151 = por %p149, %p150
      %p153 = scmp.ne.s32.totalorder %s138, %s152
      %p154 = scmp.eq.s32.totalorder %s23, 0
      %p155 = por %p153, %p154
      %s157 = sadd.s32 %s156, 1
      %p160 = scmp.eq.s32.totalorder %s17, 1
      %p161 = scmp.ne.s32.totalorder %s156, %s158
      %p162 = scmp.eq.s32.totalorder %s17, 0
      %p163 = por %p161, %p162
      %p164 = scmp.ne.s32.totalorder %s156, %s158
      %p165 = scmp.eq.s32.totalorder %s22, 1
      %p166 = por %p164, %p165
      %p167 = scmp.ne.s32.totalorder %s158, %s159
      %p168 = scmp.eq.s32.totalorder %s22, 0
      %p169 = por %p167, %p168
      %p170 = scmp.ne.s32.totalorder %s158, %s159
      %p171 = scmp.eq.s32.totalorder %s23, 1
      %p172 = por %p170, %p171
      %p174 = scmp.ne.s32.totalorder %s159, %s173
      %p175 = scmp.eq.s32.totalorder %s23, 0
      %p176 = por %p174, %p175
      %s178 = sadd.s32 %s177, 1
      %p181 = scmp.eq.s32.totalorder %s17, 1
      %p182 = scmp.ne.s32.totalorder %s177, %s179
      %p183 = scmp.eq.s32.totalorder %s17, 0
      %p184 = por %p182, %p183
      %p185 = scmp.ne.s32.totalorder %s177, %s179
      %p186 = scmp.eq.s32.totalorder %s22, 1
      %p187 = por %p185, %p186
      %p188 = scmp.ne.s32.totalorder %s179, %s180
      %p189 = scmp.eq.s32.totalorder %s22, 0
      %p190 = por %p188, %p189
      %p191 = scmp.ne.s32.totalorder %s179, %s180
      %p192 = scmp.eq.s32.totalorder %s23, 1
      %p193 = por %p191, %p192
      %p195 = scmp.ne.s32.totalorder %s180, %s194
      %p196 = scmp.eq.s32.totalorder %s23, 0
      %p197 = por %p195, %p196
      %s199 = sadd.s32 %s198, 1
      %p202 = scmp.eq.s32.totalorder %s17, 1
      %p203 = scmp.ne.s32.totalorder %s198, %s200
      %p204 = scmp.eq.s32.totalorder %s17, 0
      %p205 = por %p203, %p204
      %p206 = scmp.ne.s32.totalorder %s198, %s200
      %p207 = scmp.eq.s32.totalorder %s22, 1
      %p208 = por %p206, %p207
      %p209 = scmp.ne.s32.totalorder %s200, %s201
      %p210 = scmp.eq.s32.totalorder %s22, 0
      %p211 = por %p209, %p210
      %p212 = scmp.ne.s32.totalorder %s200, %s201
      %p213 = scmp.eq.s32.totalorder %s23, 1
      %p214 = por %p212, %p213
      %p216 = scmp.ne.s32.totalorder %s201, %s215
      %p217 = scmp.eq.s32.totalorder %s23, 0
      %p218 = por %p216, %p217
      %s220 = sadd.s32 %s219, 1
      %p223 = scmp.eq.s32.totalorder %s17, 1
      %p224 = scmp.ne.s32.totalorder %s219, %s221
      %p225 = scmp.eq.s32.totalorder %s17, 0
      %p226 = por %p224, %p225
      %p227 = scmp.ne.s32.totalorder %s219, %s221
      %p228 = scmp.eq.s32.totalorder %s22, 1
      %p229 = por %p227, %p228
      %p230 = scmp.ne.s32.totalorder %s221, %s222
      %p231 = scmp.eq.s32.totalorder %s22, 0
      %p232 = por %p230, %p231
      %p233 = scmp.ne.s32.totalorder %s221, %s222
      %p234 = scmp.eq.s32.totalorder %s23, 1
      %p235 = por %p233, %p234
      %p237 = scmp.ne.s32.totalorder %s222, %s236
      %p238 = scmp.eq.s32.totalorder %s23, 0
      %p239 = por %p237, %p238
      %s241 = sadd.s32 %s240, 1
      %p244 = scmp.eq.s32.totalorder %s17, 1
      %p245 = scmp.ne.s32.totalorder %s240, %s242
      %p246 = scmp.eq.s32.totalorder %s17, 0
      %p247 = por %p245, %p246
      %p248 = scmp.ne.s32.totalorder %s240, %s242
      %p249 = scmp.eq.s32.totalorder %s22, 1
      %p250 = por %p248, %p249
      %p251 = scmp.ne.s32.totalorder %s242, %s243
      %p252 = scmp.eq.s32.totalorder %s22, 0
      %p253 = por %p251, %p252
      %p254 = scmp.ne.s32.totalorder %s242, %s243
      %p255 = scmp.eq.s32.totalorder %s23, 1
      %p256 = por %p254, %p255
      %p258 = scmp.ne.s32.totalorder %s243, %s257
      %p259 = scmp.eq.s32.totalorder %s23, 0
      %p260 = por %p258, %p259
      %s261 = ssub.s32 %s17, %s24
      %p262 = scmp.eq.s32.totalorder %s261, 0
      %s264 = sadd.s32 %s263, 1
      %s265 = scalar_select %p262, %s263, %s264
      %p268 = pneg %p262
      %p269 = scmp.eq.s32.totalorder %s17, 1
      %p270 = por %p268, %p269
      %p271 = scmp.ne.s32.totalorder %s263, %s266
      %p272 = scmp.eq.s32.totalorder %s17, 0
      %p273 = por %p271, %p272
      %p274 = scmp.ne.s32.totalorder %s263, %s266
      %p275 = scmp.eq.s32.totalorder %s22, 1
      %p276 = por %p274, %p275
      %p277 = scmp.ne.s32.totalorder %s266, %s267
      %p278 = scmp.eq.s32.totalorder %s22, 0
      %p279 = por %p277, %p278
      %p280 = scmp.ne.s32.totalorder %s266, %s267
      %p281 = scmp.eq.s32.totalorder %s23, 1
      %p282 = por %p280, %p281
      %p284 = scmp.ne.s32.totalorder %s267, %s283
      %p285 = scmp.eq.s32.totalorder %s23, 0
      %p286 = por %p284, %p285
      %p287 = scmp.le.s32.totalorder 1, %s17
      %p288 = scmp.lt.s32.totalorder %s17, 3
      %p289 = pnand %p287, %p288
      %p290 = pneg %p289
      // Predicated region
      $region9: #{hashencoding_sdf_forward.1} parent=5 // pred_check
        _
      $region10: #{hashencoding_sdf_forward.1} parent=5 // pred_check_branch
        %292 = sbr.rel (%p289) target = $region12
      $region11: #{hashencoding_sdf_forward.1} parent=5 // pred_region
        %s293 = ssub.s32 %s17, 1
        // Predicated region
        $region13: #{hashencoding_sdf_forward.1} parent=11 // pred_check
          %p294 = pneg %p64
        $region14: #{hashencoding_sdf_forward.1} parent=11 // pred_check_branch
          %296 = sbr.rel (%p294) target = $region16
        $region15: #{hashencoding_sdf_forward.1} parent=11 // pred_region
          _
        $region16: #{hashencoding_sdf_forward.1} parent=11 // pred_fallthru
          _
        // Predicated region
        $region17: #{hashencoding_sdf_forward.1} parent=11 // pred_check
          %p297 = pneg %p85
        $region18: #{hashencoding_sdf_forward.1} parent=11 // pred_check_branch
          %299 = sbr.rel (%p297) target = $region20
        $region19: #{hashencoding_sdf_forward.1} parent=11 // pred_region
          _
        $region20: #{hashencoding_sdf_forward.1} parent=11 // pred_fallthru
          _
        // Predicated region
        $region21: #{hashencoding_sdf_forward.1} parent=11 // pred_check
          %p300 = pneg %p106
        $region22: #{hashencoding_sdf_forward.1} parent=11 // pred_check_branch
          %302 = sbr.rel (%p300) target = $region24
        $region23: #{hashencoding_sdf_forward.1} parent=11 // pred_region
          _
        $region24: #{hashencoding_sdf_forward.1} parent=11 // pred_fallthru
          _
        // Predicated region
        $region25: #{hashencoding_sdf_forward.1} parent=11 // pred_check
          %p303 = pneg %p127
        $region26: #{hashencoding_sdf_forward.1} parent=11 // pred_check_branch
          %305 = sbr.rel (%p303) target = $region28
        $region27: #{hashencoding_sdf_forward.1} parent=11 // pred_region
          _
        $region28: #{hashencoding_sdf_forward.1} parent=11 // pred_fallthru
          _
        // Predicated region
        $region29: #{hashencoding_sdf_forward.1} parent=11 // pred_check
          %p306 = pneg %p148
        $region30: #{hashencoding_sdf_forward.1} parent=11 // pred_check_branch
          %308 = sbr.rel (%p306) target = $region32
        $region31: #{hashencoding_sdf_forward.1} parent=11 // pred_region
          _
        $region32: #{hashencoding_sdf_forward.1} parent=11 // pred_fallthru
          _
        // Predicated region
        $region33: #{hashencoding_sdf_forward.1} parent=11 // pred_check
          %p309 = pneg %p169
        $region34: #{hashencoding_sdf_forward.1} parent=11 // pred_check_branch
          %311 = sbr.rel (%p309) target = $region36
        $region35: #{hashencoding_sdf_forward.1} parent=11 // pred_region
          _
        $region36: #{hashencoding_sdf_forward.1} parent=11 // pred_fallthru
          _
        // Predicated region
        $region37: #{hashencoding_sdf_forward.1} parent=11 // pred_check
          %p312 = pneg %p190
        $region38: #{hashencoding_sdf_forward.1} parent=11 // pred_check_branch
          %314 = sbr.rel (%p312) target = $region40
        $region39: #{hashencoding_sdf_forward.1} parent=11 // pred_region
          _
        $region40: #{hashencoding_sdf_forward.1} parent=11 // pred_fallthru
          _
        // Predicated region
        $region41: #{hashencoding_sdf_forward.1} parent=11 // pred_check
          %p315 = pneg %p211
        $region42: #{hashencoding_sdf_forward.1} parent=11 // pred_check_branch
          %317 = sbr.rel (%p315) target = $region44
        $region43: #{hashencoding_sdf_forward.1} parent=11 // pred_region
          _
        $region44: #{hashencoding_sdf_forward.1} parent=11 // pred_fallthru
          _
        // Predicated region
        $region45: #{hashencoding_sdf_forward.1} parent=11 // pred_check
          %p318 = pneg %p232
        $region46: #{hashencoding_sdf_forward.1} parent=11 // pred_check_branch
          %320 = sbr.rel (%p318) target = $region48
        $region47: #{hashencoding_sdf_forward.1} parent=11 // pred_region
          _
        $region48: #{hashencoding_sdf_forward.1} parent=11 // pred_fallthru
          _
        // Predicated region
        $region49: #{hashencoding_sdf_forward.1} parent=11 // pred_check
          %p321 = pneg %p253
        $region50: #{hashencoding_sdf_forward.1} parent=11 // pred_check_branch
          %323 = sbr.rel (%p321) target = $region52
        $region51: #{hashencoding_sdf_forward.1} parent=11 // pred_region
          _
        $region52: #{hashencoding_sdf_forward.1} parent=11 // pred_fallthru
          _
      $region12: #{hashencoding_sdf_forward.1} parent=5 // pred_fallthru
        _
      %p324 = scmp.lt.s32.totalorder %s17, 2
      // Predicated region
      $region53: #{hashencoding_sdf_forward.1} parent=5 // pred_check
        %p325 = pneg %p324
      $region54: #{hashencoding_sdf_forward.1} parent=5 // pred_check_branch
        %327 = sbr.rel (%p325) target = $region56
      $region55: #{hashencoding_sdf_forward.1} parent=5 // pred_region
        // Predicated region
        $region57: #{hashencoding_sdf_forward.1} parent=55 // pred_check
          %p328 = pneg %p37
        $region58: #{hashencoding_sdf_forward.1} parent=55 // pred_check_branch
          %330 = sbr.rel (%p328) target = $region60
        $region59: #{hashencoding_sdf_forward.1} parent=55 // pred_region
          %s331 = sand.u32 %s27, 1
          %s332 = sand.u32 %s27, 1
          %s333 = smul.addr %s332, 64
          %s334 = scalar_lea.vmem [#allocation2], %s333
          %s335 = smul.u32 4, %s17
          %s336 = smul.addr %s335, 4
          %s337 = scalar_lea.vmem %s0, %s336
          // Predicated region
          $region61: #{hashencoding_sdf_forward.1} parent=59 // pred_check
            _
          $region62: #{hashencoding_sdf_forward.1} parent=59 // pred_check_branch
            %339 = sbr.rel (0) target = $region64
          $region63: #{hashencoding_sdf_forward.1} parent=59 // pred_region
            // Predicated region
            $region65: #{hashencoding_sdf_forward.1} parent=63 // pred_check
              _
            $region66: #{hashencoding_sdf_forward.1} parent=63 // pred_check_branch
              %341 = sbr.rel (0) target = $region68
            $region67: #{hashencoding_sdf_forward.1} parent=63 // pred_region
              loop: start=0, step=1, limit=1
              $region69: #{hashencoding_sdf_forward.1} parent=67 // loop_pre_header
                _
              $region70: #{hashencoding_sdf_forward.1} parent=67 // loop_header
                %s343 = sphi 0, %s347
                %p344 = scmp.ge.s32.totalorder %s343, 1
                %s348 = sphi %s337, %s337
                %s349 = sphi %s334, %s334
              $region71: #{hashencoding_sdf_forward.1} parent=67 // loop_header_branch
                %346 = sbr.rel (%p344) target = $region75
              $region72: #{hashencoding_sdf_forward.1} parent=67 // loop_body
                %v350 = vld [vmem:[%s348] sm:$0xff]
                %351 = vst [vmem:[%s349] sm:$0xff] %v350
                %v352 = vld [vmem:[%s348 + $0x8] sm:$0xff]
                %353 = vst [vmem:[%s349 + $0x8] sm:$0xff] %v352
                %v354 = vld [vmem:[%s348 + $0x20] sm:$0xff]
                %355 = vst [vmem:[%s349 + $0x10] sm:$0xff] %v354
                %v356 = vld [vmem:[%s348 + $0x28] sm:$0xff]
                %357 = vst [vmem:[%s349 + $0x18] sm:$0xff] %v356
                %v358 = vld [vmem:[%s348 + $0x40] sm:$0xff]
                %359 = vst [vmem:[%s349 + $0x20] sm:$0xff] %v358
                %v360 = vld [vmem:[%s348 + $0x48] sm:$0xff]
                %361 = vst [vmem:[%s349 + $0x28] sm:$0xff] %v360
                %v362 = vld [vmem:[%s348 + $0x60] sm:$0xff]
                %363 = vst [vmem:[%s349 + $0x30] sm:$0xff] %v362
                %v364 = vld [vmem:[%s348 + $0x68] sm:$0xff]
                %365 = vst [vmem:[%s349 + $0x38] sm:$0xff] %v364
              $region73: #{hashencoding_sdf_forward.1} parent=67 // loop_footer
                %s347 = sadd.s32 1, %s343
              $region74: #{hashencoding_sdf_forward.1} parent=67 // loop_footer_branch
                %342 = sbr.rel target = $region70
              $region75: #{hashencoding_sdf_forward.1} parent=67 // loop_exit
                _
            $region68: #{hashencoding_sdf_forward.1} parent=63 // pred_fallthru
              _
            // Predicated region
            $region76: #{hashencoding_sdf_forward.1} parent=63 // pred_check
              _
            $region77: #{hashencoding_sdf_forward.1} parent=63 // pred_check_branch
              %367 = sbr.rel target = $region79
            $region78: #{hashencoding_sdf_forward.1} parent=63 // pred_region
              _
            $region79: #{hashencoding_sdf_forward.1} parent=63 // pred_fallthru
              _
          $region64: #{hashencoding_sdf_forward.1} parent=59 // pred_fallthru
            _
          %368 = vnop
        $region60: #{hashencoding_sdf_forward.1} parent=55 // pred_fallthru
          _
      $region56: #{hashencoding_sdf_forward.1} parent=5 // pred_fallthru
        _
      %p369 = scmp.le.s32.totalorder 1, %s17
      %p370 = scmp.lt.s32.totalorder %s17, 3
      %p371 = pnand %p369, %p370
      %p372 = pneg %p371
      // Predicated region
      $region80: #{hashencoding_sdf_forward.1} parent=5 // pred_check
        _
      $region81: #{hashencoding_sdf_forward.1} parent=5 // pred_check_branch
        %374 = sbr.rel (%p371) target = $region83
      $region82: #{hashencoding_sdf_forward.1} parent=5 // pred_region
        %s375 = ssub.s32 %s17, 1
        %s376 = sand.u32 %s30, 1
        %s377 = sand.u32 %s30, 1
        %s378 = smul.addr %s377, 64
        %s379 = scalar_lea.vmem [#allocation2], %s378
        // Predicated region
        $region84: #{hashencoding_sdf_forward.1} parent=82 // pred_check
          %p380 = pneg %p43
        $region85: #{hashencoding_sdf_forward.1} parent=82 // pred_check_branch
          %382 = sbr.rel (%p380) target = $region87
        $region86: #{hashencoding_sdf_forward.1} parent=82 // pred_region
          _
        $region87: #{hashencoding_sdf_forward.1} parent=82 // pred_fallthru
          _
        %s383 = sand.u32 %s30, 1
        %s384 = sand.u32 %s30, 1
        %s385 = smul.addr %s384, 64
        %s386 = scalar_lea.vmem [#allocation2], %s385
        %p387 = pneg %p43
        %p388 = pneg %p40
        %p389 = pneg %p64
        %p390 = pneg %p61
        %p391 = pneg %p85
        %p392 = pneg %p82
        %p393 = pneg %p106
        %p394 = pneg %p103
        %p395 = pneg %p127
        %p396 = pneg %p124
        %p397 = pneg %p148
        %p398 = pneg %p145
        %p399 = pneg %p169
        %p400 = pneg %p166
        %p401 = pneg %p190
        %p402 = pneg %p187
        %p403 = pneg %p211
        %p404 = pneg %p208
        %p405 = pneg %p232
        %p406 = pneg %p229
        %p407 = pneg %p253
        %p408 = pneg %p250
        %p409 = pneg %p279
        %p410 = pneg %p276
        %s411 = smul.u32 4, %s22
        %p412 = scmp.lt.s32.totalorder %s411, 7
        %s413 = scalar_select %p412, %s411, 7
        %s414 = smul.addr %s413, 8
        %s415 = scalar_lea.vmem %s11, %s414
        %s416 = smul.u32 4, %s22
        %s417 = smul.u32 4, %s22
        %p418 = scmp.lt.s32.totalorder %s417, 7
        %s419 = scalar_select %p418, %s417, 7
        %s420 = smul.addr %s419, 8
        %s421 = scalar_lea.vmem %s11, %s420
        %s422 = smul.u32 4, %s22
        %v424 = vld [vmem:[%s1] sm:$0xf]
        %v425 = vld [vmem:[%s1 + $0x4] sm:$0xf]
        %v426 = vld [vmem:[%s1 + $0x8] sm:$0xf]
        %v427 = vld [vmem:[%s1 + $0xc] sm:$0xf]
        %v428 = vld [vmem:[%s1 + $0x10] sm:$0xf]
        %v429 = vld [vmem:[%s1 + $0x14] sm:$0xf]
        %v430 = vld [vmem:[%s1 + $0x18] sm:$0xf]
        %v431 = vld [vmem:[%s1 + $0x1c] sm:$0xf]
        %v432 = vld [vmem:[%s1 + $0x20] sm:$0xf]
        %v433 = vld [vmem:[%s1 + $0x24] sm:$0xf]
        %v434 = vld [vmem:[%s1 + $0x28] sm:$0xf]
        %v435 = vld [vmem:[%s1 + $0x2c] sm:$0xf]
        %v436 = vld [vmem:[%s1 + $0x30] sm:$0xf]
        %v437 = vld [vmem:[%s1 + $0x34] sm:$0xf]
        %v438 = vld [vmem:[%s1 + $0x38] sm:$0xf]
        %v439 = vld [vmem:[%s1 + $0x3c] sm:$0xf]
        %v440 = vld [vmem:[%s379] sm:$0xff]
        %v441 = vld [vmem:[%s379 + $0x8] sm:$0xff]
        %v442 = vld [vmem:[%s379 + $0x10] sm:$0xff]
        %v443 = vld [vmem:[%s379 + $0x18] sm:$0xff]
        %v444 = vld [vmem:[%s379 + $0x20] sm:$0xff]
        %v445 = vld [vmem:[%s379 + $0x28] sm:$0xff]
        %v446 = vld [vmem:[%s379 + $0x30] sm:$0xff]
        %v447 = vld [vmem:[%s379 + $0x38] sm:$0xff]
        %v448 = vld [vmem:[%s2] sm:$0xff]
        %v449 = vld [vmem:[%s2 + $0x8] sm:$0xff]
        %v450 = vld [vmem:[%s2 + $0x10] sm:$0xff]
        %v451 = vld [vmem:[%s2 + $0x18] sm:$0xff]
        %v452 = vld [vmem:[%s2 + $0x20] sm:$0xff]
        %v453 = vld [vmem:[%s2 + $0x28] sm:$0xff]
        %v454 = vld [vmem:[%s2 + $0x30] sm:$0xff]
        %v455 = vld [vmem:[%s2 + $0x38] sm:$0xff]
        %v456 = vld [vmem:[%s2 + $0x40] sm:$0xff]
        %v457 = vld [vmem:[%s2 + $0x48] sm:$0xff]
        %v458 = vld [vmem:[%s2 + $0x50] sm:$0xff]
        %v459 = vld [vmem:[%s2 + $0x58] sm:$0xff]
        %v460 = vld [vmem:[%s2 + $0x60] sm:$0xff]
        %v461 = vld [vmem:[%s2 + $0x68] sm:$0xff]
        %v462 = vld [vmem:[%s2 + $0x70] sm:$0xff]
        %v463 = vld [vmem:[%s2 + $0x78] sm:$0xff]
        %465 = vset.pattern.permute.xlu0 0
        %466 = vperm.xlu0 %465, %v448
        %v467 = vpop.permute.xlu0 %466
        %470 = vset.pattern.permute.xlu0 0
        %471 = vperm.xlu0 %470, %v449
        %v472 = vpop.permute.xlu0 %471
        %475 = vset.pattern.permute.xlu0 0
        %476 = vperm.xlu0 %475, %v450
        %v477 = vpop.permute.xlu0 %476
        %480 = vset.pattern.permute.xlu0 0
        %481 = vperm.xlu0 %480, %v451
        %v482 = vpop.permute.xlu0 %481
        %485 = vset.pattern.permute.xlu0 0
        %486 = vperm.xlu0 %485, %v452
        %v487 = vpop.permute.xlu0 %486
        %490 = vset.pattern.permute.xlu0 0
        %491 = vperm.xlu0 %490, %v453
        %v492 = vpop.permute.xlu0 %491
        %495 = vset.pattern.permute.xlu0 0
        %496 = vperm.xlu0 %495, %v454
        %v497 = vpop.permute.xlu0 %496
        %500 = vset.pattern.permute.xlu0 0
        %501 = vperm.xlu0 %500, %v455
        %v502 = vpop.permute.xlu0 %501
        %505 = vset.pattern.permute.xlu0 0
        %506 = vperm.xlu0 %505, %v456
        %v507 = vpop.permute.xlu0 %506
        %510 = vset.pattern.permute.xlu0 0
        %511 = vperm.xlu0 %510, %v457
        %v512 = vpop.permute.xlu0 %511
        %515 = vset.pattern.permute.xlu0 0
        %516 = vperm.xlu0 %515, %v458
        %v517 = vpop.permute.xlu0 %516
        %520 = vset.pattern.permute.xlu0 0
        %521 = vperm.xlu0 %520, %v459
        %v522 = vpop.permute.xlu0 %521
        %525 = vset.pattern.permute.xlu0 0
        %526 = vperm.xlu0 %525, %v460
        %v527 = vpop.permute.xlu0 %526
        %530 = vset.pattern.permute.xlu0 0
        %531 = vperm.xlu0 %530, %v461
        %v532 = vpop.permute.xlu0 %531
        %535 = vset.pattern.permute.xlu0 0
        %536 = vperm.xlu0 %535, %v462
        %v537 = vpop.permute.xlu0 %536
        %540 = vset.pattern.permute.xlu0 0
        %541 = vperm.xlu0 %540, %v463
        %v542 = vpop.permute.xlu0 %541
        %v560 = vunpack.c.l.b16 %v424
        %v561 = vunpack.c.l.b16 %v425
        %v562 = vunpack.c.l.b16 %v426
        %v563 = vunpack.c.l.b16 %v427
        %v564 = vunpack.c.l.b16 %v428
        %v565 = vunpack.c.l.b16 %v429
        %v566 = vunpack.c.l.b16 %v430
        %v567 = vunpack.c.l.b16 %v431
        %v568 = vunpack.c.l.b16 %v432
        %v569 = vunpack.c.l.b16 %v433
        %v570 = vunpack.c.l.b16 %v434
        %v571 = vunpack.c.l.b16 %v435
        %v572 = vunpack.c.l.b16 %v436
        %v573 = vunpack.c.l.b16 %v437
        %v574 = vunpack.c.l.b16 %v438
        %v575 = vunpack.c.l.b16 %v439
        %v576 = vpack.c.b16 %v561, %v560
        %v577 = vpack.c.b16 %v563, %v562
        %v578 = vpack.c.b16 %v565, %v564
        %v579 = vpack.c.b16 %v567, %v566
        %v580 = vpack.c.b16 %v569, %v568
        %v581 = vpack.c.b16 %v571, %v570
        %v582 = vpack.c.b16 %v573, %v572
        %v583 = vpack.c.b16 %v575, %v574
        %v592 = vunpack.c.l.b16 %v440
        %v593 = vunpack.c.h.b16 %v440
        %v594 = vunpack.c.l.b16 %v441
        %v595 = vunpack.c.h.b16 %v441
        %v596 = vunpack.c.l.b16 %v442
        %v597 = vunpack.c.h.b16 %v442
        %v598 = vunpack.c.l.b16 %v443
        %v599 = vunpack.c.h.b16 %v443
        %v600 = vunpack.c.l.b16 %v444
        %v601 = vunpack.c.h.b16 %v444
        %v602 = vunpack.c.l.b16 %v445
        %v603 = vunpack.c.h.b16 %v445
        %v604 = vunpack.c.l.b16 %v446
        %v605 = vunpack.c.h.b16 %v446
        %v606 = vunpack.c.l.b16 %v447
        %v607 = vunpack.c.h.b16 %v447
        %v608 = vpack.c.b16 %v596, %v592
        %v609 = vpack.c.b16 %v597, %v593
        %v610 = vpack.c.b16 %v598, %v594
        %v611 = vpack.c.b16 %v599, %v595
        %v612 = vpack.c.b16 %v604, %v600
        %v613 = vpack.c.b16 %v605, %v601
        %v614 = vpack.c.b16 %v606, %v602
        %v615 = vpack.c.b16 %v607, %v603
        %vm624 = vcmask 261120
        %v626 = vsel %vm624, %v576, 0
        %v629 = vsel %vm624, %v577, 0
        %v632 = vsel %vm624, %v578, 0
        %v635 = vsel %vm624, %v579, 0
        %v638 = vsel %vm624, %v580, 0
        %v641 = vsel %vm624, %v581, 0
        %v644 = vsel %vm624, %v582, 0
        %v647 = vsel %vm624, %v583, 0
        %649 = vmatpush.bf16.msra.mxu0 0
        %650 = vmatpush.bf16.msra.mxu0 0
        %651 = vmatpush.bf16.msra.mxu0 0
        %652 = vmatpush.bf16.msra.mxu0 0
        %653 = vmatpush.bf16.msra.mxu0 0
        %654 = vmatpush.bf16.msra.mxu0 0
        %655 = vmatpush.bf16.msra.mxu0 %v612
        %656 = vmatpush.bf16.msra.mxu0 %v608
        %657 = vmatmul.bf16.gmra.mxu0 %v626
        %v658 = vpop.f32.mrf.mxu0
        %v659 = vadd.f32 %v467, %v658
        %v660 = vpop.f32.mrf.mxu0
        %v661 = vadd.f32 %v472, %v660
        %662 = vmatmul.bf16.gmra.mxu0 %v629
        %v663 = vpop.f32.mrf.mxu0
        %v664 = vadd.f32 %v477, %v663
        %v665 = vpop.f32.mrf.mxu0
        %v666 = vadd.f32 %v482, %v665
        %667 = vmatmul.bf16.gmra.mxu0 %v632
        %v668 = vpop.f32.mrf.mxu0
        %v669 = vadd.f32 %v487, %v668
        %v670 = vpop.f32.mrf.mxu0
        %v671 = vadd.f32 %v492, %v670
        %672 = vmatmul.bf16.gmra.mxu0 %v635
        %v673 = vpop.f32.mrf.mxu0
        %v674 = vadd.f32 %v497, %v673
        %v675 = vpop.f32.mrf.mxu0
        %v676 = vadd.f32 %v502, %v675
        %677 = vmatmul.bf16.gmra.mxu0 %v638
        %v678 = vpop.f32.mrf.mxu0
        %v679 = vadd.f32 %v507, %v678
        %v680 = vpop.f32.mrf.mxu0
        %v681 = vadd.f32 %v512, %v680
        %682 = vmatmul.bf16.gmra.mxu0 %v641
        %v683 = vpop.f32.mrf.mxu0
        %v684 = vadd.f32 %v517, %v683
        %v685 = vpop.f32.mrf.mxu0
        %v686 = vadd.f32 %v522, %v685
        %687 = vmatmul.bf16.gmra.mxu0 %v644
        %v688 = vpop.f32.mrf.mxu0
        %v689 = vadd.f32 %v527, %v688
        %v690 = vpop.f32.mrf.mxu0
        %v691 = vadd.f32 %v532, %v690
        %692 = vmatmul.bf16.gmra.mxu0 %v647
        %v693 = vpop.f32.mrf.mxu0
        %v694 = vadd.f32 %v537, %v693
        %v695 = vpop.f32.mrf.mxu0
        %v696 = vadd.f32 %v542, %v695
        %697 = vdwg.mxu0
        %698 = vmatpush.bf16.msra.mxu0 0
        %699 = vmatpush.bf16.msra.mxu0 0
        %700 = vmatpush.bf16.msra.mxu0 0
        %701 = vmatpush.bf16.msra.mxu0 0
        %702 = vmatpush.bf16.msra.mxu0 0
        %703 = vmatpush.bf16.msra.mxu0 0
        %704 = vmatpush.bf16.msra.mxu0 %v613
        %705 = vmatpush.bf16.msra.mxu0 %v609
        %706 = vmatmul.bf16.gmra.mxu0 %v626
        %v707 = vpop.f32.mrf.mxu0
        %v708 = vadd.f32 %v467, %v707
        %v709 = vpop.f32.mrf.mxu0
        %v710 = vadd.f32 %v472, %v709
        %711 = vmatmul.bf16.gmra.mxu0 %v629
        %v712 = vpop.f32.mrf.mxu0
        %v713 = vadd.f32 %v477, %v712
        %v714 = vpop.f32.mrf.mxu0
        %v715 = vadd.f32 %v482, %v714
        %716 = vmatmul.bf16.gmra.mxu0 %v632
        %v717 = vpop.f32.mrf.mxu0
        %v718 = vadd.f32 %v487, %v717
        %v719 = vpop.f32.mrf.mxu0
        %v720 = vadd.f32 %v492, %v719
        %721 = vmatmul.bf16.gmra.mxu0 %v635
        %v722 = vpop.f32.mrf.mxu0
        %v723 = vadd.f32 %v497, %v722
        %v724 = vpop.f32.mrf.mxu0
        %v725 = vadd.f32 %v502, %v724
        %726 = vmatmul.bf16.gmra.mxu0 %v638
        %v727 = vpop.f32.mrf.mxu0
        %v728 = vadd.f32 %v507, %v727
        %v729 = vpop.f32.mrf.mxu0
        %v730 = vadd.f32 %v512, %v729
        %731 = vmatmul.bf16.gmra.mxu0 %v641
        %v732 = vpop.f32.mrf.mxu0
        %v733 = vadd.f32 %v517, %v732
        %v734 = vpop.f32.mrf.mxu0
        %v735 = vadd.f32 %v522, %v734
        %736 = vmatmul.bf16.gmra.mxu0 %v644
        %v737 = vpop.f32.mrf.mxu0
        %v738 = vadd.f32 %v527, %v737
        %v739 = vpop.f32.mrf.mxu0
        %v740 = vadd.f32 %v532, %v739
        %741 = vmatmul.bf16.gmra.mxu0 %v647
        %v742 = vpop.f32.mrf.mxu0
        %v743 = vadd.f32 %v537, %v742
        %v744 = vpop.f32.mrf.mxu0
        %v745 = vadd.f32 %v542, %v744
        %746 = vdwg.mxu0
        %747 = vmatpush.bf16.msra.mxu0 0
        %748 = vmatpush.bf16.msra.mxu0 0
        %749 = vmatpush.bf16.msra.mxu0 0
        %750 = vmatpush.bf16.msra.mxu0 0
        %751 = vmatpush.bf16.msra.mxu0 0
        %752 = vmatpush.bf16.msra.mxu0 0
        %753 = vmatpush.bf16.msra.mxu0 %v614
        %754 = vmatpush.bf16.msra.mxu0 %v610
        %755 = vmatmul.bf16.gmra.mxu0 %v626
        %v756 = vpop.f32.mrf.mxu0
        %v757 = vadd.f32 %v467, %v756
        %v758 = vpop.f32.mrf.mxu0
        %v759 = vadd.f32 %v472, %v758
        %760 = vmatmul.bf16.gmra.mxu0 %v629
        %v761 = vpop.f32.mrf.mxu0
        %v762 = vadd.f32 %v477, %v761
        %v763 = vpop.f32.mrf.mxu0
        %v764 = vadd.f32 %v482, %v763
        %765 = vmatmul.bf16.gmra.mxu0 %v632
        %v766 = vpop.f32.mrf.mxu0
        %v767 = vadd.f32 %v487, %v766
        %v768 = vpop.f32.mrf.mxu0
        %v769 = vadd.f32 %v492, %v768
        %770 = vmatmul.bf16.gmra.mxu0 %v635
        %v771 = vpop.f32.mrf.mxu0
        %v772 = vadd.f32 %v497, %v771
        %v773 = vpop.f32.mrf.mxu0
        %v774 = vadd.f32 %v502, %v773
        %775 = vmatmul.bf16.gmra.mxu0 %v638
        %v776 = vpop.f32.mrf.mxu0
        %v777 = vadd.f32 %v507, %v776
        %v778 = vpop.f32.mrf.mxu0
        %v779 = vadd.f32 %v512, %v778
        %780 = vmatmul.bf16.gmra.mxu0 %v641
        %v781 = vpop.f32.mrf.mxu0
        %v782 = vadd.f32 %v517, %v781
        %v783 = vpop.f32.mrf.mxu0
        %v784 = vadd.f32 %v522, %v783
        %785 = vmatmul.bf16.gmra.mxu0 %v644
        %v786 = vpop.f32.mrf.mxu0
        %v787 = vadd.f32 %v527, %v786
        %v788 = vpop.f32.mrf.mxu0
        %v789 = vadd.f32 %v532, %v788
        %790 = vmatmul.bf16.gmra.mxu0 %v647
        %v791 = vpop.f32.mrf.mxu0
        %v792 = vadd.f32 %v537, %v791
        %v793 = vpop.f32.mrf.mxu0
        %v794 = vadd.f32 %v542, %v793
        %795 = vdwg.mxu0
        %796 = vmatpush.bf16.msra.mxu0 0
        %797 = vmatpush.bf16.msra.mxu0 0
        %798 = vmatpush.bf16.msra.mxu0 0
        %799 = vmatpush.bf16.msra.mxu0 0
        %800 = vmatpush.bf16.msra.mxu0 0
        %801 = vmatpush.bf16.msra.mxu0 0
        %802 = vmatpush.bf16.msra.mxu0 %v615
        %803 = vmatpush.bf16.msra.mxu0 %v611
        %804 = vmatmul.bf16.gmra.mxu0 %v626
        %v805 = vpop.f32.mrf.mxu0
        %v806 = vadd.f32 %v467, %v805
        %v807 = vpop.f32.mrf.mxu0
        %v808 = vadd.f32 %v472, %v807
        %809 = vmatmul.bf16.gmra.mxu0 %v629
        %v810 = vpop.f32.mrf.mxu0
        %v811 = vadd.f32 %v477, %v810
        %v812 = vpop.f32.mrf.mxu0
        %v813 = vadd.f32 %v482, %v812
        %814 = vmatmul.bf16.gmra.mxu0 %v632
        %v815 = vpop.f32.mrf.mxu0
        %v816 = vadd.f32 %v487, %v815
        %v817 = vpop.f32.mrf.mxu0
        %v818 = vadd.f32 %v492, %v817
        %819 = vmatmul.bf16.gmra.mxu0 %v635
        %v820 = vpop.f32.mrf.mxu0
        %v821 = vadd.f32 %v497, %v820
        %v822 = vpop.f32.mrf.mxu0
        %v823 = vadd.f32 %v502, %v822
        %824 = vmatmul.bf16.gmra.mxu0 %v638
        %v825 = vpop.f32.mrf.mxu0
        %v826 = vadd.f32 %v507, %v825
        %v827 = vpop.f32.mrf.mxu0
        %v828 = vadd.f32 %v512, %v827
        %829 = vmatmul.bf16.gmra.mxu0 %v641
        %v830 = vpop.f32.mrf.mxu0
        %v831 = vadd.f32 %v517, %v830
        %v832 = vpop.f32.mrf.mxu0
        %v833 = vadd.f32 %v522, %v832
        %834 = vmatmul.bf16.gmra.mxu0 %v644
        %v835 = vpop.f32.mrf.mxu0
        %v836 = vadd.f32 %v527, %v835
        %v837 = vpop.f32.mrf.mxu0
        %v838 = vadd.f32 %v532, %v837
        %839 = vmatmul.bf16.gmra.mxu0 %v647
        %v840 = vpop.f32.mrf.mxu0
        %v841 = vadd.f32 %v537, %v840
        %v842 = vpop.f32.mrf.mxu0
        %v843 = vadd.f32 %v542, %v842
        %844 = vdwg.mxu0
        %v845 = vmax.f32 %v659, 0.0
        %v846 = vmax.f32 %v708, 0.0
        %v847 = vmax.f32 %v757, 0.0
        %v848 = vmax.f32 %v806, 0.0
        %v849 = vmax.f32 %v661, 0.0
        %v850 = vmax.f32 %v710, 0.0
        %v851 = vmax.f32 %v759, 0.0
        %v852 = vmax.f32 %v808, 0.0
        %v853 = vmax.f32 %v664, 0.0
        %v854 = vmax.f32 %v713, 0.0
        %v855 = vmax.f32 %v762, 0.0
        %v856 = vmax.f32 %v811, 0.0
        %v857 = vmax.f32 %v666, 0.0
        %v858 = vmax.f32 %v715, 0.0
        %v859 = vmax.f32 %v764, 0.0
        %v860 = vmax.f32 %v813, 0.0
        %v861 = vmax.f32 %v669, 0.0
        %v862 = vmax.f32 %v718, 0.0
        %v863 = vmax.f32 %v767, 0.0
        %v864 = vmax.f32 %v816, 0.0
        %v865 = vmax.f32 %v671, 0.0
        %v866 = vmax.f32 %v720, 0.0
        %v867 = vmax.f32 %v769, 0.0
        %v868 = vmax.f32 %v818, 0.0
        %v869 = vmax.f32 %v674, 0.0
        %v870 = vmax.f32 %v723, 0.0
        %v871 = vmax.f32 %v772, 0.0
        %v872 = vmax.f32 %v821, 0.0
        %v873 = vmax.f32 %v676, 0.0
        %v874 = vmax.f32 %v725, 0.0
        %v875 = vmax.f32 %v774, 0.0
        %v876 = vmax.f32 %v823, 0.0
        %v877 = vmax.f32 %v679, 0.0
        %v878 = vmax.f32 %v728, 0.0
        %v879 = vmax.f32 %v777, 0.0
        %v880 = vmax.f32 %v826, 0.0
        %v881 = vmax.f32 %v681, 0.0
        %v882 = vmax.f32 %v730, 0.0
        %v883 = vmax.f32 %v779, 0.0
        %v884 = vmax.f32 %v828, 0.0
        %v885 = vmax.f32 %v684, 0.0
        %v886 = vmax.f32 %v733, 0.0
        %v887 = vmax.f32 %v782, 0.0
        %v888 = vmax.f32 %v831, 0.0
        %v889 = vmax.f32 %v686, 0.0
        %v890 = vmax.f32 %v735, 0.0
        %v891 = vmax.f32 %v784, 0.0
        %v892 = vmax.f32 %v833, 0.0
        %v893 = vmax.f32 %v689, 0.0
        %v894 = vmax.f32 %v738, 0.0
        %v895 = vmax.f32 %v787, 0.0
        %v896 = vmax.f32 %v836, 0.0
        %v897 = vmax.f32 %v691, 0.0
        %v898 = vmax.f32 %v740, 0.0
        %v899 = vmax.f32 %v789, 0.0
        %v900 = vmax.f32 %v838, 0.0
        %v901 = vmax.f32 %v694, 0.0
        %v902 = vmax.f32 %v743, 0.0
        %v903 = vmax.f32 %v792, 0.0
        %v904 = vmax.f32 %v841, 0.0
        %v905 = vmax.f32 %v696, 0.0
        %v906 = vmax.f32 %v745, 0.0
        %v907 = vmax.f32 %v794, 0.0
        %v908 = vmax.f32 %v843, 0.0
        %v909 = vpack.c.bf16 %v849, %v845
        %v910 = vpack.c.bf16 %v850, %v846
        %v911 = vpack.c.bf16 %v851, %v847
        %v912 = vpack.c.bf16 %v852, %v848
        %v913 = vpack.c.bf16 %v857, %v853
        %v914 = vpack.c.bf16 %v858, %v854
        %v915 = vpack.c.bf16 %v859, %v855
        %v916 = vpack.c.bf16 %v860, %v856
        %v917 = vpack.c.bf16 %v865, %v861
        %v918 = vpack.c.bf16 %v866, %v862
        %v919 = vpack.c.bf16 %v867, %v863
        %v920 = vpack.c.bf16 %v868, %v864
        %v921 = vpack.c.bf16 %v873, %v869
        %v922 = vpack.c.bf16 %v874, %v870
        %v923 = vpack.c.bf16 %v875, %v871
        %v924 = vpack.c.bf16 %v876, %v872
        %v925 = vpack.c.bf16 %v881, %v877
        %v926 = vpack.c.bf16 %v882, %v878
        %v927 = vpack.c.bf16 %v883, %v879
        %v928 = vpack.c.bf16 %v884, %v880
        %v929 = vpack.c.bf16 %v889, %v885
        %v930 = vpack.c.bf16 %v890, %v886
        %v931 = vpack.c.bf16 %v891, %v887
        %v932 = vpack.c.bf16 %v892, %v888
        %v933 = vpack.c.bf16 %v897, %v893
        %v934 = vpack.c.bf16 %v898, %v894
        %v935 = vpack.c.bf16 %v899, %v895
        %v936 = vpack.c.bf16 %v900, %v896
        %v937 = vpack.c.bf16 %v905, %v901
        %v938 = vpack.c.bf16 %v906, %v902
        %v939 = vpack.c.bf16 %v907, %v903
        %v940 = vpack.c.bf16 %v908, %v904
        %v941 = vld [vmem:[%s3] sm:$0xf]
        %v942 = vld [vmem:[%s3 + $0x4] sm:$0xf]
        %v943 = vld [vmem:[%s3 + $0x8] sm:$0xf]
        %v944 = vld [vmem:[%s3 + $0xc] sm:$0xf]
        %v945 = vld [vmem:[%s3 + $0x10] sm:$0xf]
        %v946 = vld [vmem:[%s3 + $0x14] sm:$0xf]
        %v947 = vld [vmem:[%s3 + $0x18] sm:$0xf]
        %v948 = vld [vmem:[%s3 + $0x1c] sm:$0xf]
        %v949 = vld [vmem:[%s3 + $0x20] sm:$0xf]
        %v950 = vld [vmem:[%s3 + $0x24] sm:$0xf]
        %v951 = vld [vmem:[%s3 + $0x28] sm:$0xf]
        %v952 = vld [vmem:[%s3 + $0x2c] sm:$0xf]
        %v953 = vld [vmem:[%s3 + $0x30] sm:$0xf]
        %v954 = vld [vmem:[%s3 + $0x34] sm:$0xf]
        %v955 = vld [vmem:[%s3 + $0x38] sm:$0xf]
        %v956 = vld [vmem:[%s3 + $0x3c] sm:$0xf]
        %v957 = vld [vmem:[%s4] sm:$0xff]
        %v958 = vld [vmem:[%s4 + $0x8] sm:$0xff]
        %v959 = vld [vmem:[%s4 + $0x10] sm:$0xff]
        %v960 = vld [vmem:[%s4 + $0x18] sm:$0xff]
        %v961 = vld [vmem:[%s4 + $0x20] sm:$0xff]
        %v962 = vld [vmem:[%s4 + $0x28] sm:$0xff]
        %v963 = vld [vmem:[%s4 + $0x30] sm:$0xff]
        %v964 = vld [vmem:[%s4 + $0x38] sm:$0xff]
        %v965 = vld [vmem:[%s4 + $0x40] sm:$0xff]
        %v966 = vld [vmem:[%s4 + $0x48] sm:$0xff]
        %v967 = vld [vmem:[%s4 + $0x50] sm:$0xff]
        %v968 = vld [vmem:[%s4 + $0x58] sm:$0xff]
        %v969 = vld [vmem:[%s4 + $0x60] sm:$0xff]
        %v970 = vld [vmem:[%s4 + $0x68] sm:$0xff]
        %v971 = vld [vmem:[%s4 + $0x70] sm:$0xff]
        %v972 = vld [vmem:[%s4 + $0x78] sm:$0xff]
        %974 = vset.pattern.permute.xlu0 0
        %975 = vperm.xlu0 %974, %v957
        %v976 = vpop.permute.xlu0 %975
        %979 = vset.pattern.permute.xlu0 0
        %980 = vperm.xlu0 %979, %v958
        %v981 = vpop.permute.xlu0 %980
        %984 = vset.pattern.permute.xlu0 0
        %985 = vperm.xlu0 %984, %v959
        %v986 = vpop.permute.xlu0 %985
        %989 = vset.pattern.permute.xlu0 0
        %990 = vperm.xlu0 %989, %v960
        %v991 = vpop.permute.xlu0 %990
        %994 = vset.pattern.permute.xlu0 0
        %995 = vperm.xlu0 %994, %v961
        %v996 = vpop.permute.xlu0 %995
        %999 = vset.pattern.permute.xlu0 0
        %1000 = vperm.xlu0 %999, %v962
        %v1001 = vpop.permute.xlu0 %1000
        %1004 = vset.pattern.permute.xlu0 0
        %1005 = vperm.xlu0 %1004, %v963
        %v1006 = vpop.permute.xlu0 %1005
        %1009 = vset.pattern.permute.xlu0 0
        %1010 = vperm.xlu0 %1009, %v964
        %v1011 = vpop.permute.xlu0 %1010
        %1014 = vset.pattern.permute.xlu0 0
        %1015 = vperm.xlu0 %1014, %v965
        %v1016 = vpop.permute.xlu0 %1015
        %1019 = vset.pattern.permute.xlu0 0
        %1020 = vperm.xlu0 %1019, %v966
        %v1021 = vpop.permute.xlu0 %1020
        %1024 = vset.pattern.permute.xlu0 0
        %1025 = vperm.xlu0 %1024, %v967
        %v1026 = vpop.permute.xlu0 %1025
        %1029 = vset.pattern.permute.xlu0 0
        %1030 = vperm.xlu0 %1029, %v968
        %v1031 = vpop.permute.xlu0 %1030
        %1034 = vset.pattern.permute.xlu0 0
        %1035 = vperm.xlu0 %1034, %v969
        %v1036 = vpop.permute.xlu0 %1035
        %1039 = vset.pattern.permute.xlu0 0
        %1040 = vperm.xlu0 %1039, %v970
        %v1041 = vpop.permute.xlu0 %1040
        %1044 = vset.pattern.permute.xlu0 0
        %1045 = vperm.xlu0 %1044, %v971
        %v1046 = vpop.permute.xlu0 %1045
        %1049 = vset.pattern.permute.xlu0 0
        %1050 = vperm.xlu0 %1049, %v972
        %v1051 = vpop.permute.xlu0 %1050
        %v1069 = vunpack.c.l.b16 %v941
        %v1070 = vunpack.c.l.b16 %v942
        %v1071 = vunpack.c.l.b16 %v943
        %v1072 = vunpack.c.l.b16 %v944
        %v1073 = vunpack.c.l.b16 %v945
        %v1074 = vunpack.c.l.b16 %v946
        %v1075 = vunpack.c.l.b16 %v947
        %v1076 = vunpack.c.l.b16 %v948
        %v1077 = vunpack.c.l.b16 %v949
        %v1078 = vunpack.c.l.b16 %v950
        %v1079 = vunpack.c.l.b16 %v951
        %v1080 = vunpack.c.l.b16 %v952
        %v1081 = vunpack.c.l.b16 %v953
        %v1082 = vunpack.c.l.b16 %v954
        %v1083 = vunpack.c.l.b16 %v955
        %v1084 = vunpack.c.l.b16 %v956
        %v1085 = vpack.c.b16 %v1070, %v1069
        %v1086 = vpack.c.b16 %v1072, %v1071
        %v1087 = vpack.c.b16 %v1074, %v1073
        %v1088 = vpack.c.b16 %v1076, %v1075
        %v1089 = vpack.c.b16 %v1078, %v1077
        %v1090 = vpack.c.b16 %v1080, %v1079
        %v1091 = vpack.c.b16 %v1082, %v1081
        %v1092 = vpack.c.b16 %v1084, %v1083
        %1101 = vmatpush.bf16.msra.mxu0 %v937
        %1102 = vmatpush.bf16.msra.mxu0 %v933
        %1103 = vmatpush.bf16.msra.mxu0 %v929
        %1104 = vmatpush.bf16.msra.mxu0 %v925
        %1105 = vmatpush.bf16.msra.mxu0 %v921
        %1106 = vmatpush.bf16.msra.mxu0 %v917
        %1107 = vmatpush.bf16.msra.mxu0 %v913
        %1108 = vmatpush.bf16.msra.mxu0 %v909
        %1109 = vmatmul.bf16.gmra.mxu0 %v1085
        %v1110 = vpop.f32.mrf.mxu0
        %v1111 = vadd.f32 %v976, %v1110
        %v1112 = vpop.f32.mrf.mxu0
        %v1113 = vadd.f32 %v981, %v1112
        %1114 = vmatmul.bf16.gmra.mxu0 %v1086
        %v1115 = vpop.f32.mrf.mxu0
        %v1116 = vadd.f32 %v986, %v1115
        %v1117 = vpop.f32.mrf.mxu0
        %v1118 = vadd.f32 %v991, %v1117
        %1119 = vmatmul.bf16.gmra.mxu0 %v1087
        %v1120 = vpop.f32.mrf.mxu0
        %v1121 = vadd.f32 %v996, %v1120
        %v1122 = vpop.f32.mrf.mxu0
        %v1123 = vadd.f32 %v1001, %v1122
        %1124 = vmatmul.bf16.gmra.mxu0 %v1088
        %v1125 = vpop.f32.mrf.mxu0
        %v1126 = vadd.f32 %v1006, %v1125
        %v1127 = vpop.f32.mrf.mxu0
        %v1128 = vadd.f32 %v1011, %v1127
        %1129 = vmatmul.bf16.gmra.mxu0 %v1089
        %v1130 = vpop.f32.mrf.mxu0
        %v1131 = vadd.f32 %v1016, %v1130
        %v1132 = vpop.f32.mrf.mxu0
        %v1133 = vadd.f32 %v1021, %v1132
        %1134 = vmatmul.bf16.gmra.mxu0 %v1090
        %v1135 = vpop.f32.mrf.mxu0
        %v1136 = vadd.f32 %v1026, %v1135
        %v1137 = vpop.f32.mrf.mxu0
        %v1138 = vadd.f32 %v1031, %v1137
        %1139 = vmatmul.bf16.gmra.mxu0 %v1091
        %v1140 = vpop.f32.mrf.mxu0
        %v1141 = vadd.f32 %v1036, %v1140
        %v1142 = vpop.f32.mrf.mxu0
        %v1143 = vadd.f32 %v1041, %v1142
        %1144 = vmatmul.bf16.gmra.mxu0 %v1092
        %v1145 = vpop.f32.mrf.mxu0
        %v1146 = vadd.f32 %v1046, %v1145
        %v1147 = vpop.f32.mrf.mxu0
        %v1148 = vadd.f32 %v1051, %v1147
        %1149 = vdwg.mxu0
        %1150 = vmatpush.bf16.msra.mxu0 %v938
        %1151 = vmatpush.bf16.msra.mxu0 %v934
        %1152 = vmatpush.bf16.msra.mxu0 %v930
        %1153 = vmatpush.bf16.msra.mxu0 %v926
        %1154 = vmatpush.bf16.msra.mxu0 %v922
        %1155 = vmatpush.bf16.msra.mxu0 %v918
        %1156 = vmatpush.bf16.msra.mxu0 %v914
        %1157 = vmatpush.bf16.msra.mxu0 %v910
        %1158 = vmatmul.bf16.gmra.mxu0 %v1085
        %v1159 = vpop.f32.mrf.mxu0
        %v1160 = vadd.f32 %v976, %v1159
        %v1161 = vpop.f32.mrf.mxu0
        %v1162 = vadd.f32 %v981, %v1161
        %1163 = vmatmul.bf16.gmra.mxu0 %v1086
        %v1164 = vpop.f32.mrf.mxu0
        %v1165 = vadd.f32 %v986, %v1164
        %v1166 = vpop.f32.mrf.mxu0
        %v1167 = vadd.f32 %v991, %v1166
        %1168 = vmatmul.bf16.gmra.mxu0 %v1087
        %v1169 = vpop.f32.mrf.mxu0
        %v1170 = vadd.f32 %v996, %v1169
        %v1171 = vpop.f32.mrf.mxu0
        %v1172 = vadd.f32 %v1001, %v1171
        %1173 = vmatmul.bf16.gmra.mxu0 %v1088
        %v1174 = vpop.f32.mrf.mxu0
        %v1175 = vadd.f32 %v1006, %v1174
        %v1176 = vpop.f32.mrf.mxu0
        %v1177 = vadd.f32 %v1011, %v1176
        %1178 = vmatmul.bf16.gmra.mxu0 %v1089
        %v1179 = vpop.f32.mrf.mxu0
        %v1180 = vadd.f32 %v1016, %v1179
        %v1181 = vpop.f32.mrf.mxu0
        %v1182 = vadd.f32 %v1021, %v1181
        %1183 = vmatmul.bf16.gmra.mxu0 %v1090
        %v1184 = vpop.f32.mrf.mxu0
        %v1185 = vadd.f32 %v1026, %v1184
        %v1186 = vpop.f32.mrf.mxu0
        %v1187 = vadd.f32 %v1031, %v1186
        %1188 = vmatmul.bf16.gmra.mxu0 %v1091
        %v1189 = vpop.f32.mrf.mxu0
        %v1190 = vadd.f32 %v1036, %v1189
        %v1191 = vpop.f32.mrf.mxu0
        %v1192 = vadd.f32 %v1041, %v1191
        %1193 = vmatmul.bf16.gmra.mxu0 %v1092
        %v1194 = vpop.f32.mrf.mxu0
        %v1195 = vadd.f32 %v1046, %v1194
        %v1196 = vpop.f32.mrf.mxu0
        %v1197 = vadd.f32 %v1051, %v1196
        %1198 = vdwg.mxu0
        %1199 = vmatpush.bf16.msra.mxu0 %v939
        %1200 = vmatpush.bf16.msra.mxu0 %v935
        %1201 = vmatpush.bf16.msra.mxu0 %v931
        %1202 = vmatpush.bf16.msra.mxu0 %v927
        %1203 = vmatpush.bf16.msra.mxu0 %v923
        %1204 = vmatpush.bf16.msra.mxu0 %v919
        %1205 = vmatpush.bf16.msra.mxu0 %v915
        %1206 = vmatpush.bf16.msra.mxu0 %v911
        %1207 = vmatmul.bf16.gmra.mxu0 %v1085
        %v1208 = vpop.f32.mrf.mxu0
        %v1209 = vadd.f32 %v976, %v1208
        %v1210 = vpop.f32.mrf.mxu0
        %v1211 = vadd.f32 %v981, %v1210
        %1212 = vmatmul.bf16.gmra.mxu0 %v1086
        %v1213 = vpop.f32.mrf.mxu0
        %v1214 = vadd.f32 %v986, %v1213
        %v1215 = vpop.f32.mrf.mxu0
        %v1216 = vadd.f32 %v991, %v1215
        %1217 = vmatmul.bf16.gmra.mxu0 %v1087
        %v1218 = vpop.f32.mrf.mxu0
        %v1219 = vadd.f32 %v996, %v1218
        %v1220 = vpop.f32.mrf.mxu0
        %v1221 = vadd.f32 %v1001, %v1220
        %1222 = vmatmul.bf16.gmra.mxu0 %v1088
        %v1223 = vpop.f32.mrf.mxu0
        %v1224 = vadd.f32 %v1006, %v1223
        %v1225 = vpop.f32.mrf.mxu0
        %v1226 = vadd.f32 %v1011, %v1225
        %1227 = vmatmul.bf16.gmra.mxu0 %v1089
        %v1228 = vpop.f32.mrf.mxu0
        %v1229 = vadd.f32 %v1016, %v1228
        %v1230 = vpop.f32.mrf.mxu0
        %v1231 = vadd.f32 %v1021, %v1230
        %1232 = vmatmul.bf16.gmra.mxu0 %v1090
        %v1233 = vpop.f32.mrf.mxu0
        %v1234 = vadd.f32 %v1026, %v1233
        %v1235 = vpop.f32.mrf.mxu0
        %v1236 = vadd.f32 %v1031, %v1235
        %1237 = vmatmul.bf16.gmra.mxu0 %v1091
        %v1238 = vpop.f32.mrf.mxu0
        %v1239 = vadd.f32 %v1036, %v1238
        %v1240 = vpop.f32.mrf.mxu0
        %v1241 = vadd.f32 %v1041, %v1240
        %1242 = vmatmul.bf16.gmra.mxu0 %v1092
        %v1243 = vpop.f32.mrf.mxu0
        %v1244 = vadd.f32 %v1046, %v1243
        %v1245 = vpop.f32.mrf.mxu0
        %v1246 = vadd.f32 %v1051, %v1245
        %1247 = vdwg.mxu0
        %1248 = vmatpush.bf16.msra.mxu0 %v940
        %1249 = vmatpush.bf16.msra.mxu0 %v936
        %1250 = vmatpush.bf16.msra.mxu0 %v932
        %1251 = vmatpush.bf16.msra.mxu0 %v928
        %1252 = vmatpush.bf16.msra.mxu0 %v924
        %1253 = vmatpush.bf16.msra.mxu0 %v920
        %1254 = vmatpush.bf16.msra.mxu0 %v916
        %1255 = vmatpush.bf16.msra.mxu0 %v912
        %1256 = vmatmul.bf16.gmra.mxu0 %v1085
        %v1257 = vpop.f32.mrf.mxu0
        %v1258 = vadd.f32 %v976, %v1257
        %v1259 = vpop.f32.mrf.mxu0
        %v1260 = vadd.f32 %v981, %v1259
        %1261 = vmatmul.bf16.gmra.mxu0 %v1086
        %v1262 = vpop.f32.mrf.mxu0
        %v1263 = vadd.f32 %v986, %v1262
        %v1264 = vpop.f32.mrf.mxu0
        %v1265 = vadd.f32 %v991, %v1264
        %1266 = vmatmul.bf16.gmra.mxu0 %v1087
        %v1267 = vpop.f32.mrf.mxu0
        %v1268 = vadd.f32 %v996, %v1267
        %v1269 = vpop.f32.mrf.mxu0
        %v1270 = vadd.f32 %v1001, %v1269
        %1271 = vmatmul.bf16.gmra.mxu0 %v1088
        %v1272 = vpop.f32.mrf.mxu0
        %v1273 = vadd.f32 %v1006, %v1272
        %v1274 = vpop.f32.mrf.mxu0
        %v1275 = vadd.f32 %v1011, %v1274
        %1276 = vmatmul.bf16.gmra.mxu0 %v1089
        %v1277 = vpop.f32.mrf.mxu0
        %v1278 = vadd.f32 %v1016, %v1277
        %v1279 = vpop.f32.mrf.mxu0
        %v1280 = vadd.f32 %v1021, %v1279
        %1281 = vmatmul.bf16.gmra.mxu0 %v1090
        %v1282 = vpop.f32.mrf.mxu0
        %v1283 = vadd.f32 %v1026, %v1282
        %v1284 = vpop.f32.mrf.mxu0
        %v1285 = vadd.f32 %v1031, %v1284
        %1286 = vmatmul.bf16.gmra.mxu0 %v1091
        %v1287 = vpop.f32.mrf.mxu0
        %v1288 = vadd.f32 %v1036, %v1287
        %v1289 = vpop.f32.mrf.mxu0
        %v1290 = vadd.f32 %v1041, %v1289
        %1291 = vmatmul.bf16.gmra.mxu0 %v1092
        %v1292 = vpop.f32.mrf.mxu0
        %v1293 = vadd.f32 %v1046, %v1292
        %v1294 = vpop.f32.mrf.mxu0
        %v1295 = vadd.f32 %v1051, %v1294
        %1296 = vdwg.mxu0
        %v1297 = vmax.f32 %v1111, 0.0
        %v1298 = vmax.f32 %v1160, 0.0
        %v1299 = vmax.f32 %v1209, 0.0
        %v1300 = vmax.f32 %v1258, 0.0
        %v1301 = vmax.f32 %v1113, 0.0
        %v1302 = vmax.f32 %v1162, 0.0
        %v1303 = vmax.f32 %v1211, 0.0
        %v1304 = vmax.f32 %v1260, 0.0
        %v1305 = vmax.f32 %v1116, 0.0
        %v1306 = vmax.f32 %v1165, 0.0
        %v1307 = vmax.f32 %v1214, 0.0
        %v1308 = vmax.f32 %v1263, 0.0
        %v1309 = vmax.f32 %v1118, 0.0
        %v1310 = vmax.f32 %v1167, 0.0
        %v1311 = vmax.f32 %v1216, 0.0
        %v1312 = vmax.f32 %v1265, 0.0
        %v1313 = vmax.f32 %v1121, 0.0
        %v1314 = vmax.f32 %v1170, 0.0
        %v1315 = vmax.f32 %v1219, 0.0
        %v1316 = vmax.f32 %v1268, 0.0
        %v1317 = vmax.f32 %v1123, 0.0
        %v1318 = vmax.f32 %v1172, 0.0
        %v1319 = vmax.f32 %v1221, 0.0
        %v1320 = vmax.f32 %v1270, 0.0
        %v1321 = vmax.f32 %v1126, 0.0
        %v1322 = vmax.f32 %v1175, 0.0
        %v1323 = vmax.f32 %v1224, 0.0
        %v1324 = vmax.f32 %v1273, 0.0
        %v1325 = vmax.f32 %v1128, 0.0
        %v1326 = vmax.f32 %v1177, 0.0
        %v1327 = vmax.f32 %v1226, 0.0
        %v1328 = vmax.f32 %v1275, 0.0
        %v1329 = vmax.f32 %v1131, 0.0
        %v1330 = vmax.f32 %v1180, 0.0
        %v1331 = vmax.f32 %v1229, 0.0
        %v1332 = vmax.f32 %v1278, 0.0
        %v1333 = vmax.f32 %v1133, 0.0
        %v1334 = vmax.f32 %v1182, 0.0
        %v1335 = vmax.f32 %v1231, 0.0
        %v1336 = vmax.f32 %v1280, 0.0
        %v1337 = vmax.f32 %v1136, 0.0
        %v1338 = vmax.f32 %v1185, 0.0
        %v1339 = vmax.f32 %v1234, 0.0
        %v1340 = vmax.f32 %v1283, 0.0
        %v1341 = vmax.f32 %v1138, 0.0
        %v1342 = vmax.f32 %v1187, 0.0
        %v1343 = vmax.f32 %v1236, 0.0
        %v1344 = vmax.f32 %v1285, 0.0
        %v1345 = vmax.f32 %v1141, 0.0
        %v1346 = vmax.f32 %v1190, 0.0
        %v1347 = vmax.f32 %v1239, 0.0
        %v1348 = vmax.f32 %v1288, 0.0
        %v1349 = vmax.f32 %v1143, 0.0
        %v1350 = vmax.f32 %v1192, 0.0
        %v1351 = vmax.f32 %v1241, 0.0
        %v1352 = vmax.f32 %v1290, 0.0
        %v1353 = vmax.f32 %v1146, 0.0
        %v1354 = vmax.f32 %v1195, 0.0
        %v1355 = vmax.f32 %v1244, 0.0
        %v1356 = vmax.f32 %v1293, 0.0
        %v1357 = vmax.f32 %v1148, 0.0
        %v1358 = vmax.f32 %v1197, 0.0
        %v1359 = vmax.f32 %v1246, 0.0
        %v1360 = vmax.f32 %v1295, 0.0
        %v1361 = vpack.c.bf16 %v1301, %v1297
        %v1362 = vpack.c.bf16 %v1302, %v1298
        %v1363 = vpack.c.bf16 %v1303, %v1299
        %v1364 = vpack.c.bf16 %v1304, %v1300
        %v1365 = vpack.c.bf16 %v1309, %v1305
        %v1366 = vpack.c.bf16 %v1310, %v1306
        %v1367 = vpack.c.bf16 %v1311, %v1307
        %v1368 = vpack.c.bf16 %v1312, %v1308
        %v1369 = vpack.c.bf16 %v1317, %v1313
        %v1370 = vpack.c.bf16 %v1318, %v1314
        %v1371 = vpack.c.bf16 %v1319, %v1315
        %v1372 = vpack.c.bf16 %v1320, %v1316
        %v1373 = vpack.c.bf16 %v1325, %v1321
        %v1374 = vpack.c.bf16 %v1326, %v1322
        %v1375 = vpack.c.bf16 %v1327, %v1323
        %v1376 = vpack.c.bf16 %v1328, %v1324
        %v1377 = vpack.c.bf16 %v1333, %v1329
        %v1378 = vpack.c.bf16 %v1334, %v1330
        %v1379 = vpack.c.bf16 %v1335, %v1331
        %v1380 = vpack.c.bf16 %v1336, %v1332
        %v1381 = vpack.c.bf16 %v1341, %v1337
        %v1382 = vpack.c.bf16 %v1342, %v1338
        %v1383 = vpack.c.bf16 %v1343, %v1339
        %v1384 = vpack.c.bf16 %v1344, %v1340
        %v1385 = vpack.c.bf16 %v1349, %v1345
        %v1386 = vpack.c.bf16 %v1350, %v1346
        %v1387 = vpack.c.bf16 %v1351, %v1347
        %v1388 = vpack.c.bf16 %v1352, %v1348
        %v1389 = vpack.c.bf16 %v1357, %v1353
        %v1390 = vpack.c.bf16 %v1358, %v1354
        %v1391 = vpack.c.bf16 %v1359, %v1355
        %v1392 = vpack.c.bf16 %v1360, %v1356
        %v1393 = vld [vmem:[%s5] sm:$0xf]
        %v1394 = vld [vmem:[%s5 + $0x4] sm:$0xf]
        %v1395 = vld [vmem:[%s5 + $0x8] sm:$0xf]
        %v1396 = vld [vmem:[%s5 + $0xc] sm:$0xf]
        %v1397 = vld [vmem:[%s5 + $0x10] sm:$0xf]
        %v1398 = vld [vmem:[%s5 + $0x14] sm:$0xf]
        %v1399 = vld [vmem:[%s5 + $0x18] sm:$0xf]
        %v1400 = vld [vmem:[%s5 + $0x1c] sm:$0xf]
        %v1401 = vld [vmem:[%s5 + $0x20] sm:$0xf]
        %v1402 = vld [vmem:[%s5 + $0x24] sm:$0xf]
        %v1403 = vld [vmem:[%s5 + $0x28] sm:$0xf]
        %v1404 = vld [vmem:[%s5 + $0x2c] sm:$0xf]
        %v1405 = vld [vmem:[%s5 + $0x30] sm:$0xf]
        %v1406 = vld [vmem:[%s5 + $0x34] sm:$0xf]
        %v1407 = vld [vmem:[%s5 + $0x38] sm:$0xf]
        %v1408 = vld [vmem:[%s5 + $0x3c] sm:$0xf]
        %v1409 = vld [vmem:[%s6] sm:$0xff]
        %v1410 = vld [vmem:[%s6 + $0x8] sm:$0xff]
        %v1411 = vld [vmem:[%s6 + $0x10] sm:$0xff]
        %v1412 = vld [vmem:[%s6 + $0x18] sm:$0xff]
        %v1413 = vld [vmem:[%s6 + $0x20] sm:$0xff]
        %v1414 = vld [vmem:[%s6 + $0x28] sm:$0xff]
        %v1415 = vld [vmem:[%s6 + $0x30] sm:$0xff]
        %v1416 = vld [vmem:[%s6 + $0x38] sm:$0xff]
        %v1417 = vld [vmem:[%s6 + $0x40] sm:$0xff]
        %v1418 = vld [vmem:[%s6 + $0x48] sm:$0xff]
        %v1419 = vld [vmem:[%s6 + $0x50] sm:$0xff]
        %v1420 = vld [vmem:[%s6 + $0x58] sm:$0xff]
        %v1421 = vld [vmem:[%s6 + $0x60] sm:$0xff]
        %v1422 = vld [vmem:[%s6 + $0x68] sm:$0xff]
        %v1423 = vld [vmem:[%s6 + $0x70] sm:$0xff]
        %v1424 = vld [vmem:[%s6 + $0x78] sm:$0xff]
        %1426 = vset.pattern.permute.xlu0 0
        %1427 = vperm.xlu0 %1426, %v1409
        %v1428 = vpop.permute.xlu0 %1427
        %1431 = vset.pattern.permute.xlu0 0
        %1432 = vperm.xlu0 %1431, %v1410
        %v1433 = vpop.permute.xlu0 %1432
        %1436 = vset.pattern.permute.xlu0 0
        %1437 = vperm.xlu0 %1436, %v1411
        %v1438 = vpop.permute.xlu0 %1437
        %1441 = vset.pattern.permute.xlu0 0
        %1442 = vperm.xlu0 %1441, %v1412
        %v1443 = vpop.permute.xlu0 %1442
        %1446 = vset.pattern.permute.xlu0 0
        %1447 = vperm.xlu0 %1446, %v1413
        %v1448 = vpop.permute.xlu0 %1447
        %1451 = vset.pattern.permute.xlu0 0
        %1452 = vperm.xlu0 %1451, %v1414
        %v1453 = vpop.permute.xlu0 %1452
        %1456 = vset.pattern.permute.xlu0 0
        %1457 = vperm.xlu0 %1456, %v1415
        %v1458 = vpop.permute.xlu0 %1457
        %1461 = vset.pattern.permute.xlu0 0
        %1462 = vperm.xlu0 %1461, %v1416
        %v1463 = vpop.permute.xlu0 %1462
        %1466 = vset.pattern.permute.xlu0 0
        %1467 = vperm.xlu0 %1466, %v1417
        %v1468 = vpop.permute.xlu0 %1467
        %1471 = vset.pattern.permute.xlu0 0
        %1472 = vperm.xlu0 %1471, %v1418
        %v1473 = vpop.permute.xlu0 %1472
        %1476 = vset.pattern.permute.xlu0 0
        %1477 = vperm.xlu0 %1476, %v1419
        %v1478 = vpop.permute.xlu0 %1477
        %1481 = vset.pattern.permute.xlu0 0
        %1482 = vperm.xlu0 %1481, %v1420
        %v1483 = vpop.permute.xlu0 %1482
        %1486 = vset.pattern.permute.xlu0 0
        %1487 = vperm.xlu0 %1486, %v1421
        %v1488 = vpop.permute.xlu0 %1487
        %1491 = vset.pattern.permute.xlu0 0
        %1492 = vperm.xlu0 %1491, %v1422
        %v1493 = vpop.permute.xlu0 %1492
        %1496 = vset.pattern.permute.xlu0 0
        %1497 = vperm.xlu0 %1496, %v1423
        %v1498 = vpop.permute.xlu0 %1497
        %1501 = vset.pattern.permute.xlu0 0
        %1502 = vperm.xlu0 %1501, %v1424
        %v1503 = vpop.permute.xlu0 %1502
        %v1521 = vunpack.c.l.b16 %v1393
        %v1522 = vunpack.c.l.b16 %v1394
        %v1523 = vunpack.c.l.b16 %v1395
        %v1524 = vunpack.c.l.b16 %v1396
        %v1525 = vunpack.c.l.b16 %v1397
        %v1526 = vunpack.c.l.b16 %v1398
        %v1527 = vunpack.c.l.b16 %v1399
        %v1528 = vunpack.c.l.b16 %v1400
        %v1529 = vunpack.c.l.b16 %v1401
        %v1530 = vunpack.c.l.b16 %v1402
        %v1531 = vunpack.c.l.b16 %v1403
        %v1532 = vunpack.c.l.b16 %v1404
        %v1533 = vunpack.c.l.b16 %v1405
        %v1534 = vunpack.c.l.b16 %v1406
        %v1535 = vunpack.c.l.b16 %v1407
        %v1536 = vunpack.c.l.b16 %v1408
        %v1537 = vpack.c.b16 %v1522, %v1521
        %v1538 = vpack.c.b16 %v1524, %v1523
        %v1539 = vpack.c.b16 %v1526, %v1525
        %v1540 = vpack.c.b16 %v1528, %v1527
        %v1541 = vpack.c.b16 %v1530, %v1529
        %v1542 = vpack.c.b16 %v1532, %v1531
        %v1543 = vpack.c.b16 %v1534, %v1533
        %v1544 = vpack.c.b16 %v1536, %v1535
        %1553 = vmatpush.bf16.msra.mxu0 %v1389
        %1554 = vmatpush.bf16.msra.mxu0 %v1385
        %1555 = vmatpush.bf16.msra.mxu0 %v1381
        %1556 = vmatpush.bf16.msra.mxu0 %v1377
        %1557 = vmatpush.bf16.msra.mxu0 %v1373
        %1558 = vmatpush.bf16.msra.mxu0 %v1369
        %1559 = vmatpush.bf16.msra.mxu0 %v1365
        %1560 = vmatpush.bf16.msra.mxu0 %v1361
        %1561 = vmatmul.bf16.gmra.mxu0 %v1537
        %v1562 = vpop.f32.mrf.mxu0
        %v1563 = vadd.f32 %v1428, %v1562
        %v1564 = vpop.f32.mrf.mxu0
        %v1565 = vadd.f32 %v1433, %v1564
        %1566 = vmatmul.bf16.gmra.mxu0 %v1538
        %v1567 = vpop.f32.mrf.mxu0
        %v1568 = vadd.f32 %v1438, %v1567
        %v1569 = vpop.f32.mrf.mxu0
        %v1570 = vadd.f32 %v1443, %v1569
        %1571 = vmatmul.bf16.gmra.mxu0 %v1539
        %v1572 = vpop.f32.mrf.mxu0
        %v1573 = vadd.f32 %v1448, %v1572
        %v1574 = vpop.f32.mrf.mxu0
        %v1575 = vadd.f32 %v1453, %v1574
        %1576 = vmatmul.bf16.gmra.mxu0 %v1540
        %v1577 = vpop.f32.mrf.mxu0
        %v1578 = vadd.f32 %v1458, %v1577
        %v1579 = vpop.f32.mrf.mxu0
        %v1580 = vadd.f32 %v1463, %v1579
        %1581 = vmatmul.bf16.gmra.mxu0 %v1541
        %v1582 = vpop.f32.mrf.mxu0
        %v1583 = vadd.f32 %v1468, %v1582
        %v1584 = vpop.f32.mrf.mxu0
        %v1585 = vadd.f32 %v1473, %v1584
        %1586 = vmatmul.bf16.gmra.mxu0 %v1542
        %v1587 = vpop.f32.mrf.mxu0
        %v1588 = vadd.f32 %v1478, %v1587
        %v1589 = vpop.f32.mrf.mxu0
        %v1590 = vadd.f32 %v1483, %v1589
        %1591 = vmatmul.bf16.gmra.mxu0 %v1543
        %v1592 = vpop.f32.mrf.mxu0
        %v1593 = vadd.f32 %v1488, %v1592
        %v1594 = vpop.f32.mrf.mxu0
        %v1595 = vadd.f32 %v1493, %v1594
        %1596 = vmatmul.bf16.gmra.mxu0 %v1544
        %v1597 = vpop.f32.mrf.mxu0
        %v1598 = vadd.f32 %v1498, %v1597
        %v1599 = vpop.f32.mrf.mxu0
        %v1600 = vadd.f32 %v1503, %v1599
        %1601 = vdwg.mxu0
        %1602 = vmatpush.bf16.msra.mxu0 %v1390
        %1603 = vmatpush.bf16.msra.mxu0 %v1386
        %1604 = vmatpush.bf16.msra.mxu0 %v1382
        %1605 = vmatpush.bf16.msra.mxu0 %v1378
        %1606 = vmatpush.bf16.msra.mxu0 %v1374
        %1607 = vmatpush.bf16.msra.mxu0 %v1370
        %1608 = vmatpush.bf16.msra.mxu0 %v1366
        %1609 = vmatpush.bf16.msra.mxu0 %v1362
        %1610 = vmatmul.bf16.gmra.mxu0 %v1537
        %v1611 = vpop.f32.mrf.mxu0
        %v1612 = vadd.f32 %v1428, %v1611
        %v1613 = vpop.f32.mrf.mxu0
        %v1614 = vadd.f32 %v1433, %v1613
        %1615 = vmatmul.bf16.gmra.mxu0 %v1538
        %v1616 = vpop.f32.mrf.mxu0
        %v1617 = vadd.f32 %v1438, %v1616
        %v1618 = vpop.f32.mrf.mxu0
        %v1619 = vadd.f32 %v1443, %v1618
        %1620 = vmatmul.bf16.gmra.mxu0 %v1539
        %v1621 = vpop.f32.mrf.mxu0
        %v1622 = vadd.f32 %v1448, %v1621
        %v1623 = vpop.f32.mrf.mxu0
        %v1624 = vadd.f32 %v1453, %v1623
        %1625 = vmatmul.bf16.gmra.mxu0 %v1540
        %v1626 = vpop.f32.mrf.mxu0
        %v1627 = vadd.f32 %v1458, %v1626
        %v1628 = vpop.f32.mrf.mxu0
        %v1629 = vadd.f32 %v1463, %v1628
        %1630 = vmatmul.bf16.gmra.mxu0 %v1541
        %v1631 = vpop.f32.mrf.mxu0
        %v1632 = vadd.f32 %v1468, %v1631
        %v1633 = vpop.f32.mrf.mxu0
        %v1634 = vadd.f32 %v1473, %v1633
        %1635 = vmatmul.bf16.gmra.mxu0 %v1542
        %v1636 = vpop.f32.mrf.mxu0
        %v1637 = vadd.f32 %v1478, %v1636
        %v1638 = vpop.f32.mrf.mxu0
        %v1639 = vadd.f32 %v1483, %v1638
        %1640 = vmatmul.bf16.gmra.mxu0 %v1543
        %v1641 = vpop.f32.mrf.mxu0
        %v1642 = vadd.f32 %v1488, %v1641
        %v1643 = vpop.f32.mrf.mxu0
        %v1644 = vadd.f32 %v1493, %v1643
        %1645 = vmatmul.bf16.gmra.mxu0 %v1544
        %v1646 = vpop.f32.mrf.mxu0
        %v1647 = vadd.f32 %v1498, %v1646
        %v1648 = vpop.f32.mrf.mxu0
        %v1649 = vadd.f32 %v1503, %v1648
        %1650 = vdwg.mxu0
        %1651 = vmatpush.bf16.msra.mxu0 %v1391
        %1652 = vmatpush.bf16.msra.mxu0 %v1387
        %1653 = vmatpush.bf16.msra.mxu0 %v1383
        %1654 = vmatpush.bf16.msra.mxu0 %v1379
        %1655 = vmatpush.bf16.msra.mxu0 %v1375
        %1656 = vmatpush.bf16.msra.mxu0 %v1371
        %1657 = vmatpush.bf16.msra.mxu0 %v1367
        %1658 = vmatpush.bf16.msra.mxu0 %v1363
        %1659 = vmatmul.bf16.gmra.mxu0 %v1537
        %v1660 = vpop.f32.mrf.mxu0
        %v1661 = vadd.f32 %v1428, %v1660
        %v1662 = vpop.f32.mrf.mxu0
        %v1663 = vadd.f32 %v1433, %v1662
        %1664 = vmatmul.bf16.gmra.mxu0 %v1538
        %v1665 = vpop.f32.mrf.mxu0
        %v1666 = vadd.f32 %v1438, %v1665
        %v1667 = vpop.f32.mrf.mxu0
        %v1668 = vadd.f32 %v1443, %v1667
        %1669 = vmatmul.bf16.gmra.mxu0 %v1539
        %v1670 = vpop.f32.mrf.mxu0
        %v1671 = vadd.f32 %v1448, %v1670
        %v1672 = vpop.f32.mrf.mxu0
        %v1673 = vadd.f32 %v1453, %v1672
        %1674 = vmatmul.bf16.gmra.mxu0 %v1540
        %v1675 = vpop.f32.mrf.mxu0
        %v1676 = vadd.f32 %v1458, %v1675
        %v1677 = vpop.f32.mrf.mxu0
        %v1678 = vadd.f32 %v1463, %v1677
        %1679 = vmatmul.bf16.gmra.mxu0 %v1541
        %v1680 = vpop.f32.mrf.mxu0
        %v1681 = vadd.f32 %v1468, %v1680
        %v1682 = vpop.f32.mrf.mxu0
        %v1683 = vadd.f32 %v1473, %v1682
        %1684 = vmatmul.bf16.gmra.mxu0 %v1542
        %v1685 = vpop.f32.mrf.mxu0
        %v1686 = vadd.f32 %v1478, %v1685
        %v1687 = vpop.f32.mrf.mxu0
        %v1688 = vadd.f32 %v1483, %v1687
        %1689 = vmatmul.bf16.gmra.mxu0 %v1543
        %v1690 = vpop.f32.mrf.mxu0
        %v1691 = vadd.f32 %v1488, %v1690
        %v1692 = vpop.f32.mrf.mxu0
        %v1693 = vadd.f32 %v1493, %v1692
        %1694 = vmatmul.bf16.gmra.mxu0 %v1544
        %v1695 = vpop.f32.mrf.mxu0
        %v1696 = vadd.f32 %v1498, %v1695
        %v1697 = vpop.f32.mrf.mxu0
        %v1698 = vadd.f32 %v1503, %v1697
        %1699 = vdwg.mxu0
        %1700 = vmatpush.bf16.msra.mxu0 %v1392
        %1701 = vmatpush.bf16.msra.mxu0 %v1388
        %1702 = vmatpush.bf16.msra.mxu0 %v1384
        %1703 = vmatpush.bf16.msra.mxu0 %v1380
        %1704 = vmatpush.bf16.msra.mxu0 %v1376
        %1705 = vmatpush.bf16.msra.mxu0 %v1372
        %1706 = vmatpush.bf16.msra.mxu0 %v1368
        %1707 = vmatpush.bf16.msra.mxu0 %v1364
        %1708 = vmatmul.bf16.gmra.mxu0 %v1537
        %v1709 = vpop.f32.mrf.mxu0
        %v1710 = vadd.f32 %v1428, %v1709
        %v1711 = vpop.f32.mrf.mxu0
        %v1712 = vadd.f32 %v1433, %v1711
        %1713 = vmatmul.bf16.gmra.mxu0 %v1538
        %v1714 = vpop.f32.mrf.mxu0
        %v1715 = vadd.f32 %v1438, %v1714
        %v1716 = vpop.f32.mrf.mxu0
        %v1717 = vadd.f32 %v1443, %v1716
        %1718 = vmatmul.bf16.gmra.mxu0 %v1539
        %v1719 = vpop.f32.mrf.mxu0
        %v1720 = vadd.f32 %v1448, %v1719
        %v1721 = vpop.f32.mrf.mxu0
        %v1722 = vadd.f32 %v1453, %v1721
        %1723 = vmatmul.bf16.gmra.mxu0 %v1540
        %v1724 = vpop.f32.mrf.mxu0
        %v1725 = vadd.f32 %v1458, %v1724
        %v1726 = vpop.f32.mrf.mxu0
        %v1727 = vadd.f32 %v1463, %v1726
        %1728 = vmatmul.bf16.gmra.mxu0 %v1541
        %v1729 = vpop.f32.mrf.mxu0
        %v1730 = vadd.f32 %v1468, %v1729
        %v1731 = vpop.f32.mrf.mxu0
        %v1732 = vadd.f32 %v1473, %v1731
        %1733 = vmatmul.bf16.gmra.mxu0 %v1542
        %v1734 = vpop.f32.mrf.mxu0
        %v1735 = vadd.f32 %v1478, %v1734
        %v1736 = vpop.f32.mrf.mxu0
        %v1737 = vadd.f32 %v1483, %v1736
        %1738 = vmatmul.bf16.gmra.mxu0 %v1543
        %v1739 = vpop.f32.mrf.mxu0
        %v1740 = vadd.f32 %v1488, %v1739
        %v1741 = vpop.f32.mrf.mxu0
        %v1742 = vadd.f32 %v1493, %v1741
        %1743 = vmatmul.bf16.gmra.mxu0 %v1544
        %v1744 = vpop.f32.mrf.mxu0
        %v1745 = vadd.f32 %v1498, %v1744
        %v1746 = vpop.f32.mrf.mxu0
        %v1747 = vadd.f32 %v1503, %v1746
        %1748 = vdwg.mxu0
        %v1749 = vmax.f32 %v1563, 0.0
        %v1750 = vmax.f32 %v1612, 0.0
        %v1751 = vmax.f32 %v1661, 0.0
        %v1752 = vmax.f32 %v1710, 0.0
        %v1753 = vmax.f32 %v1565, 0.0
        %v1754 = vmax.f32 %v1614, 0.0
        %v1755 = vmax.f32 %v1663, 0.0
        %v1756 = vmax.f32 %v1712, 0.0
        %v1757 = vmax.f32 %v1568, 0.0
        %v1758 = vmax.f32 %v1617, 0.0
        %v1759 = vmax.f32 %v1666, 0.0
        %v1760 = vmax.f32 %v1715, 0.0
        %v1761 = vmax.f32 %v1570, 0.0
        %v1762 = vmax.f32 %v1619, 0.0
        %v1763 = vmax.f32 %v1668, 0.0
        %v1764 = vmax.f32 %v1717, 0.0
        %v1765 = vmax.f32 %v1573, 0.0
        %v1766 = vmax.f32 %v1622, 0.0
        %v1767 = vmax.f32 %v1671, 0.0
        %v1768 = vmax.f32 %v1720, 0.0
        %v1769 = vmax.f32 %v1575, 0.0
        %v1770 = vmax.f32 %v1624, 0.0
        %v1771 = vmax.f32 %v1673, 0.0
        %v1772 = vmax.f32 %v1722, 0.0
        %v1773 = vmax.f32 %v1578, 0.0
        %v1774 = vmax.f32 %v1627, 0.0
        %v1775 = vmax.f32 %v1676, 0.0
        %v1776 = vmax.f32 %v1725, 0.0
        %v1777 = vmax.f32 %v1580, 0.0
        %v1778 = vmax.f32 %v1629, 0.0
        %v1779 = vmax.f32 %v1678, 0.0
        %v1780 = vmax.f32 %v1727, 0.0
        %v1781 = vmax.f32 %v1583, 0.0
        %v1782 = vmax.f32 %v1632, 0.0
        %v1783 = vmax.f32 %v1681, 0.0
        %v1784 = vmax.f32 %v1730, 0.0
        %v1785 = vmax.f32 %v1585, 0.0
        %v1786 = vmax.f32 %v1634, 0.0
        %v1787 = vmax.f32 %v1683, 0.0
        %v1788 = vmax.f32 %v1732, 0.0
        %v1789 = vmax.f32 %v1588, 0.0
        %v1790 = vmax.f32 %v1637, 0.0
        %v1791 = vmax.f32 %v1686, 0.0
        %v1792 = vmax.f32 %v1735, 0.0
        %v1793 = vmax.f32 %v1590, 0.0
        %v1794 = vmax.f32 %v1639, 0.0
        %v1795 = vmax.f32 %v1688, 0.0
        %v1796 = vmax.f32 %v1737, 0.0
        %v1797 = vmax.f32 %v1593, 0.0
        %v1798 = vmax.f32 %v1642, 0.0
        %v1799 = vmax.f32 %v1691, 0.0
        %v1800 = vmax.f32 %v1740, 0.0
        %v1801 = vmax.f32 %v1595, 0.0
        %v1802 = vmax.f32 %v1644, 0.0
        %v1803 = vmax.f32 %v1693, 0.0
        %v1804 = vmax.f32 %v1742, 0.0
        %v1805 = vmax.f32 %v1598, 0.0
        %v1806 = vmax.f32 %v1647, 0.0
        %v1807 = vmax.f32 %v1696, 0.0
        %v1808 = vmax.f32 %v1745, 0.0
        %v1809 = vmax.f32 %v1600, 0.0
        %v1810 = vmax.f32 %v1649, 0.0
        %v1811 = vmax.f32 %v1698, 0.0
        %v1812 = vmax.f32 %v1747, 0.0
        %v1813 = vpack.c.bf16 %v1753, %v1749
        %v1814 = vpack.c.bf16 %v1754, %v1750
        %v1815 = vpack.c.bf16 %v1755, %v1751
        %v1816 = vpack.c.bf16 %v1756, %v1752
        %v1817 = vpack.c.bf16 %v1761, %v1757
        %v1818 = vpack.c.bf16 %v1762, %v1758
        %v1819 = vpack.c.bf16 %v1763, %v1759
        %v1820 = vpack.c.bf16 %v1764, %v1760
        %v1821 = vpack.c.bf16 %v1769, %v1765
        %v1822 = vpack.c.bf16 %v1770, %v1766
        %v1823 = vpack.c.bf16 %v1771, %v1767
        %v1824 = vpack.c.bf16 %v1772, %v1768
        %v1825 = vpack.c.bf16 %v1777, %v1773
        %v1826 = vpack.c.bf16 %v1778, %v1774
        %v1827 = vpack.c.bf16 %v1779, %v1775
        %v1828 = vpack.c.bf16 %v1780, %v1776
        %v1829 = vpack.c.bf16 %v1785, %v1781
        %v1830 = vpack.c.bf16 %v1786, %v1782
        %v1831 = vpack.c.bf16 %v1787, %v1783
        %v1832 = vpack.c.bf16 %v1788, %v1784
        %v1833 = vpack.c.bf16 %v1793, %v1789
        %v1834 = vpack.c.bf16 %v1794, %v1790
        %v1835 = vpack.c.bf16 %v1795, %v1791
        %v1836 = vpack.c.bf16 %v1796, %v1792
        %v1837 = vpack.c.bf16 %v1801, %v1797
        %v1838 = vpack.c.bf16 %v1802, %v1798
        %v1839 = vpack.c.bf16 %v1803, %v1799
        %v1840 = vpack.c.bf16 %v1804, %v1800
        %v1841 = vpack.c.bf16 %v1809, %v1805
        %v1842 = vpack.c.bf16 %v1810, %v1806
        %v1843 = vpack.c.bf16 %v1811, %v1807
        %v1844 = vpack.c.bf16 %v1812, %v1808
        %v1845 = vld [vmem:[%s7] sm:$0xf]
        %v1846 = vld [vmem:[%s7 + $0x4] sm:$0xf]
        %v1847 = vld [vmem:[%s7 + $0x8] sm:$0xf]
        %v1848 = vld [vmem:[%s7 + $0xc] sm:$0xf]
        %v1849 = vld [vmem:[%s7 + $0x10] sm:$0xf]
        %v1850 = vld [vmem:[%s7 + $0x14] sm:$0xf]
        %v1851 = vld [vmem:[%s7 + $0x18] sm:$0xf]
        %v1852 = vld [vmem:[%s7 + $0x1c] sm:$0xf]
        %v1853 = vld [vmem:[%s7 + $0x20] sm:$0xf]
        %v1854 = vld [vmem:[%s7 + $0x24] sm:$0xf]
        %v1855 = vld [vmem:[%s7 + $0x28] sm:$0xf]
        %v1856 = vld [vmem:[%s7 + $0x2c] sm:$0xf]
        %v1857 = vld [vmem:[%s7 + $0x30] sm:$0xf]
        %v1858 = vld [vmem:[%s7 + $0x34] sm:$0xf]
        %v1859 = vld [vmem:[%s7 + $0x38] sm:$0xf]
        %v1860 = vld [vmem:[%s7 + $0x3c] sm:$0xf]
        %v1861 = vld [vmem:[%s8] sm:$0xff]
        %v1862 = vld [vmem:[%s8 + $0x8] sm:$0xff]
        %v1863 = vld [vmem:[%s8 + $0x10] sm:$0xff]
        %v1864 = vld [vmem:[%s8 + $0x18] sm:$0xff]
        %v1865 = vld [vmem:[%s8 + $0x20] sm:$0xff]
        %v1866 = vld [vmem:[%s8 + $0x28] sm:$0xff]
        %v1867 = vld [vmem:[%s8 + $0x30] sm:$0xff]
        %v1868 = vld [vmem:[%s8 + $0x38] sm:$0xff]
        %v1869 = vld [vmem:[%s8 + $0x40] sm:$0xff]
        %v1870 = vld [vmem:[%s8 + $0x48] sm:$0xff]
        %v1871 = vld [vmem:[%s8 + $0x50] sm:$0xff]
        %v1872 = vld [vmem:[%s8 + $0x58] sm:$0xff]
        %v1873 = vld [vmem:[%s8 + $0x60] sm:$0xff]
        %v1874 = vld [vmem:[%s8 + $0x68] sm:$0xff]
        %v1875 = vld [vmem:[%s8 + $0x70] sm:$0xff]
        %v1876 = vld [vmem:[%s8 + $0x78] sm:$0xff]
        %1878 = vset.pattern.permute.xlu0 0
        %1879 = vperm.xlu0 %1878, %v1861
        %v1880 = vpop.permute.xlu0 %1879
        %1883 = vset.pattern.permute.xlu0 0
        %1884 = vperm.xlu0 %1883, %v1862
        %v1885 = vpop.permute.xlu0 %1884
        %1888 = vset.pattern.permute.xlu0 0
        %1889 = vperm.xlu0 %1888, %v1863
        %v1890 = vpop.permute.xlu0 %1889
        %1893 = vset.pattern.permute.xlu0 0
        %1894 = vperm.xlu0 %1893, %v1864
        %v1895 = vpop.permute.xlu0 %1894
        %1898 = vset.pattern.permute.xlu0 0
        %1899 = vperm.xlu0 %1898, %v1865
        %v1900 = vpop.permute.xlu0 %1899
        %1903 = vset.pattern.permute.xlu0 0
        %1904 = vperm.xlu0 %1903, %v1866
        %v1905 = vpop.permute.xlu0 %1904
        %1908 = vset.pattern.permute.xlu0 0
        %1909 = vperm.xlu0 %1908, %v1867
        %v1910 = vpop.permute.xlu0 %1909
        %1913 = vset.pattern.permute.xlu0 0
        %1914 = vperm.xlu0 %1913, %v1868
        %v1915 = vpop.permute.xlu0 %1914
        %1918 = vset.pattern.permute.xlu0 0
        %1919 = vperm.xlu0 %1918, %v1869
        %v1920 = vpop.permute.xlu0 %1919
        %1923 = vset.pattern.permute.xlu0 0
        %1924 = vperm.xlu0 %1923, %v1870
        %v1925 = vpop.permute.xlu0 %1924
        %1928 = vset.pattern.permute.xlu0 0
        %1929 = vperm.xlu0 %1928, %v1871
        %v1930 = vpop.permute.xlu0 %1929
        %1933 = vset.pattern.permute.xlu0 0
        %1934 = vperm.xlu0 %1933, %v1872
        %v1935 = vpop.permute.xlu0 %1934
        %1938 = vset.pattern.permute.xlu0 0
        %1939 = vperm.xlu0 %1938, %v1873
        %v1940 = vpop.permute.xlu0 %1939
        %1943 = vset.pattern.permute.xlu0 0
        %1944 = vperm.xlu0 %1943, %v1874
        %v1945 = vpop.permute.xlu0 %1944
        %1948 = vset.pattern.permute.xlu0 0
        %1949 = vperm.xlu0 %1948, %v1875
        %v1950 = vpop.permute.xlu0 %1949
        %1953 = vset.pattern.permute.xlu0 0
        %1954 = vperm.xlu0 %1953, %v1876
        %v1955 = vpop.permute.xlu0 %1954
        %v1973 = vunpack.c.l.b16 %v1845
        %v1974 = vunpack.c.l.b16 %v1846
        %v1975 = vunpack.c.l.b16 %v1847
        %v1976 = vunpack.c.l.b16 %v1848
        %v1977 = vunpack.c.l.b16 %v1849
        %v1978 = vunpack.c.l.b16 %v1850
        %v1979 = vunpack.c.l.b16 %v1851
        %v1980 = vunpack.c.l.b16 %v1852
        %v1981 = vunpack.c.l.b16 %v1853
        %v1982 = vunpack.c.l.b16 %v1854
        %v1983 = vunpack.c.l.b16 %v1855
        %v1984 = vunpack.c.l.b16 %v1856
        %v1985 = vunpack.c.l.b16 %v1857
        %v1986 = vunpack.c.l.b16 %v1858
        %v1987 = vunpack.c.l.b16 %v1859
        %v1988 = vunpack.c.l.b16 %v1860
        %v1989 = vpack.c.b16 %v1974, %v1973
        %v1990 = vpack.c.b16 %v1976, %v1975
        %v1991 = vpack.c.b16 %v1978, %v1977
        %v1992 = vpack.c.b16 %v1980, %v1979
        %v1993 = vpack.c.b16 %v1982, %v1981
        %v1994 = vpack.c.b16 %v1984, %v1983
        %v1995 = vpack.c.b16 %v1986, %v1985
        %v1996 = vpack.c.b16 %v1988, %v1987
        %2005 = vmatpush.bf16.msra.mxu0 %v1841
        %2006 = vmatpush.bf16.msra.mxu0 %v1837
        %2007 = vmatpush.bf16.msra.mxu0 %v1833
        %2008 = vmatpush.bf16.msra.mxu0 %v1829
        %2009 = vmatpush.bf16.msra.mxu0 %v1825
        %2010 = vmatpush.bf16.msra.mxu0 %v1821
        %2011 = vmatpush.bf16.msra.mxu0 %v1817
        %2012 = vmatpush.bf16.msra.mxu0 %v1813
        %2013 = vmatmul.bf16.gmra.mxu0 %v1989
        %v2014 = vpop.f32.mrf.mxu0
        %v2015 = vadd.f32 %v1880, %v2014
        %v2016 = vpop.f32.mrf.mxu0
        %v2017 = vadd.f32 %v1885, %v2016
        %2018 = vmatmul.bf16.gmra.mxu0 %v1990
        %v2019 = vpop.f32.mrf.mxu0
        %v2020 = vadd.f32 %v1890, %v2019
        %v2021 = vpop.f32.mrf.mxu0
        %v2022 = vadd.f32 %v1895, %v2021
        %2023 = vmatmul.bf16.gmra.mxu0 %v1991
        %v2024 = vpop.f32.mrf.mxu0
        %v2025 = vadd.f32 %v1900, %v2024
        %v2026 = vpop.f32.mrf.mxu0
        %v2027 = vadd.f32 %v1905, %v2026
        %2028 = vmatmul.bf16.gmra.mxu0 %v1992
        %v2029 = vpop.f32.mrf.mxu0
        %v2030 = vadd.f32 %v1910, %v2029
        %v2031 = vpop.f32.mrf.mxu0
        %v2032 = vadd.f32 %v1915, %v2031
        %2033 = vmatmul.bf16.gmra.mxu0 %v1993
        %v2034 = vpop.f32.mrf.mxu0
        %v2035 = vadd.f32 %v1920, %v2034
        %v2036 = vpop.f32.mrf.mxu0
        %v2037 = vadd.f32 %v1925, %v2036
        %2038 = vmatmul.bf16.gmra.mxu0 %v1994
        %v2039 = vpop.f32.mrf.mxu0
        %v2040 = vadd.f32 %v1930, %v2039
        %v2041 = vpop.f32.mrf.mxu0
        %v2042 = vadd.f32 %v1935, %v2041
        %2043 = vmatmul.bf16.gmra.mxu0 %v1995
        %v2044 = vpop.f32.mrf.mxu0
        %v2045 = vadd.f32 %v1940, %v2044
        %v2046 = vpop.f32.mrf.mxu0
        %v2047 = vadd.f32 %v1945, %v2046
        %2048 = vmatmul.bf16.gmra.mxu0 %v1996
        %v2049 = vpop.f32.mrf.mxu0
        %v2050 = vadd.f32 %v1950, %v2049
        %v2051 = vpop.f32.mrf.mxu0
        %v2052 = vadd.f32 %v1955, %v2051
        %2053 = vdwg.mxu0
        %2054 = vmatpush.bf16.msra.mxu0 %v1842
        %2055 = vmatpush.bf16.msra.mxu0 %v1838
        %2056 = vmatpush.bf16.msra.mxu0 %v1834
        %2057 = vmatpush.bf16.msra.mxu0 %v1830
        %2058 = vmatpush.bf16.msra.mxu0 %v1826
        %2059 = vmatpush.bf16.msra.mxu0 %v1822
        %2060 = vmatpush.bf16.msra.mxu0 %v1818
        %2061 = vmatpush.bf16.msra.mxu0 %v1814
        %2062 = vmatmul.bf16.gmra.mxu0 %v1989
        %v2063 = vpop.f32.mrf.mxu0
        %v2064 = vadd.f32 %v1880, %v2063
        %v2065 = vpop.f32.mrf.mxu0
        %v2066 = vadd.f32 %v1885, %v2065
        %2067 = vmatmul.bf16.gmra.mxu0 %v1990
        %v2068 = vpop.f32.mrf.mxu0
        %v2069 = vadd.f32 %v1890, %v2068
        %v2070 = vpop.f32.mrf.mxu0
        %v2071 = vadd.f32 %v1895, %v2070
        %2072 = vmatmul.bf16.gmra.mxu0 %v1991
        %v2073 = vpop.f32.mrf.mxu0
        %v2074 = vadd.f32 %v1900, %v2073
        %v2075 = vpop.f32.mrf.mxu0
        %v2076 = vadd.f32 %v1905, %v2075
        %2077 = vmatmul.bf16.gmra.mxu0 %v1992
        %v2078 = vpop.f32.mrf.mxu0
        %v2079 = vadd.f32 %v1910, %v2078
        %v2080 = vpop.f32.mrf.mxu0
        %v2081 = vadd.f32 %v1915, %v2080
        %2082 = vmatmul.bf16.gmra.mxu0 %v1993
        %v2083 = vpop.f32.mrf.mxu0
        %v2084 = vadd.f32 %v1920, %v2083
        %v2085 = vpop.f32.mrf.mxu0
        %v2086 = vadd.f32 %v1925, %v2085
        %2087 = vmatmul.bf16.gmra.mxu0 %v1994
        %v2088 = vpop.f32.mrf.mxu0
        %v2089 = vadd.f32 %v1930, %v2088
        %v2090 = vpop.f32.mrf.mxu0
        %v2091 = vadd.f32 %v1935, %v2090
        %2092 = vmatmul.bf16.gmra.mxu0 %v1995
        %v2093 = vpop.f32.mrf.mxu0
        %v2094 = vadd.f32 %v1940, %v2093
        %v2095 = vpop.f32.mrf.mxu0
        %v2096 = vadd.f32 %v1945, %v2095
        %2097 = vmatmul.bf16.gmra.mxu0 %v1996
        %v2098 = vpop.f32.mrf.mxu0
        %v2099 = vadd.f32 %v1950, %v2098
        %v2100 = vpop.f32.mrf.mxu0
        %v2101 = vadd.f32 %v1955, %v2100
        %2102 = vdwg.mxu0
        %2103 = vmatpush.bf16.msra.mxu0 %v1843
        %2104 = vmatpush.bf16.msra.mxu0 %v1839
        %2105 = vmatpush.bf16.msra.mxu0 %v1835
        %2106 = vmatpush.bf16.msra.mxu0 %v1831
        %2107 = vmatpush.bf16.msra.mxu0 %v1827
        %2108 = vmatpush.bf16.msra.mxu0 %v1823
        %2109 = vmatpush.bf16.msra.mxu0 %v1819
        %2110 = vmatpush.bf16.msra.mxu0 %v1815
        %2111 = vmatmul.bf16.gmra.mxu0 %v1989
        %v2112 = vpop.f32.mrf.mxu0
        %v2113 = vadd.f32 %v1880, %v2112
        %v2114 = vpop.f32.mrf.mxu0
        %v2115 = vadd.f32 %v1885, %v2114
        %2116 = vmatmul.bf16.gmra.mxu0 %v1990
        %v2117 = vpop.f32.mrf.mxu0
        %v2118 = vadd.f32 %v1890, %v2117
        %v2119 = vpop.f32.mrf.mxu0
        %v2120 = vadd.f32 %v1895, %v2119
        %2121 = vmatmul.bf16.gmra.mxu0 %v1991
        %v2122 = vpop.f32.mrf.mxu0
        %v2123 = vadd.f32 %v1900, %v2122
        %v2124 = vpop.f32.mrf.mxu0
        %v2125 = vadd.f32 %v1905, %v2124
        %2126 = vmatmul.bf16.gmra.mxu0 %v1992
        %v2127 = vpop.f32.mrf.mxu0
        %v2128 = vadd.f32 %v1910, %v2127
        %v2129 = vpop.f32.mrf.mxu0
        %v2130 = vadd.f32 %v1915, %v2129
        %2131 = vmatmul.bf16.gmra.mxu0 %v1993
        %v2132 = vpop.f32.mrf.mxu0
        %v2133 = vadd.f32 %v1920, %v2132
        %v2134 = vpop.f32.mrf.mxu0
        %v2135 = vadd.f32 %v1925, %v2134
        %2136 = vmatmul.bf16.gmra.mxu0 %v1994
        %v2137 = vpop.f32.mrf.mxu0
        %v2138 = vadd.f32 %v1930, %v2137
        %v2139 = vpop.f32.mrf.mxu0
        %v2140 = vadd.f32 %v1935, %v2139
        %2141 = vmatmul.bf16.gmra.mxu0 %v1995
        %v2142 = vpop.f32.mrf.mxu0
        %v2143 = vadd.f32 %v1940, %v2142
        %v2144 = vpop.f32.mrf.mxu0
        %v2145 = vadd.f32 %v1945, %v2144
        %2146 = vmatmul.bf16.gmra.mxu0 %v1996
        %v2147 = vpop.f32.mrf.mxu0
        %v2148 = vadd.f32 %v1950, %v2147
        %v2149 = vpop.f32.mrf.mxu0
        %v2150 = vadd.f32 %v1955, %v2149
        %2151 = vdwg.mxu0
        %2152 = vmatpush.bf16.msra.mxu0 %v1844
        %2153 = vmatpush.bf16.msra.mxu0 %v1840
        %2154 = vmatpush.bf16.msra.mxu0 %v1836
        %2155 = vmatpush.bf16.msra.mxu0 %v1832
        %2156 = vmatpush.bf16.msra.mxu0 %v1828
        %2157 = vmatpush.bf16.msra.mxu0 %v1824
        %2158 = vmatpush.bf16.msra.mxu0 %v1820
        %2159 = vmatpush.bf16.msra.mxu0 %v1816
        %2160 = vmatmul.bf16.gmra.mxu0 %v1989
        %v2161 = vpop.f32.mrf.mxu0
        %v2162 = vadd.f32 %v1880, %v2161
        %v2163 = vpop.f32.mrf.mxu0
        %v2164 = vadd.f32 %v1885, %v2163
        %2165 = vmatmul.bf16.gmra.mxu0 %v1990
        %v2166 = vpop.f32.mrf.mxu0
        %v2167 = vadd.f32 %v1890, %v2166
        %v2168 = vpop.f32.mrf.mxu0
        %v2169 = vadd.f32 %v1895, %v2168
        %2170 = vmatmul.bf16.gmra.mxu0 %v1991
        %v2171 = vpop.f32.mrf.mxu0
        %v2172 = vadd.f32 %v1900, %v2171
        %v2173 = vpop.f32.mrf.mxu0
        %v2174 = vadd.f32 %v1905, %v2173
        %2175 = vmatmul.bf16.gmra.mxu0 %v1992
        %v2176 = vpop.f32.mrf.mxu0
        %v2177 = vadd.f32 %v1910, %v2176
        %v2178 = vpop.f32.mrf.mxu0
        %v2179 = vadd.f32 %v1915, %v2178
        %2180 = vmatmul.bf16.gmra.mxu0 %v1993
        %v2181 = vpop.f32.mrf.mxu0
        %v2182 = vadd.f32 %v1920, %v2181
        %v2183 = vpop.f32.mrf.mxu0
        %v2184 = vadd.f32 %v1925, %v2183
        %2185 = vmatmul.bf16.gmra.mxu0 %v1994
        %v2186 = vpop.f32.mrf.mxu0
        %v2187 = vadd.f32 %v1930, %v2186
        %v2188 = vpop.f32.mrf.mxu0
        %v2189 = vadd.f32 %v1935, %v2188
        %2190 = vmatmul.bf16.gmra.mxu0 %v1995
        %v2191 = vpop.f32.mrf.mxu0
        %v2192 = vadd.f32 %v1940, %v2191
        %v2193 = vpop.f32.mrf.mxu0
        %v2194 = vadd.f32 %v1945, %v2193
        %2195 = vmatmul.bf16.gmra.mxu0 %v1996
        %v2196 = vpop.f32.mrf.mxu0
        %v2197 = vadd.f32 %v1950, %v2196
        %v2198 = vpop.f32.mrf.mxu0
        %v2199 = vadd.f32 %v1955, %v2198
        %2200 = vdwg.mxu0
        %v2201 = vmax.f32 %v2015, 0.0
        %v2202 = vmax.f32 %v2064, 0.0
        %v2203 = vmax.f32 %v2113, 0.0
        %v2204 = vmax.f32 %v2162, 0.0
        %v2205 = vmax.f32 %v2017, 0.0
        %v2206 = vmax.f32 %v2066, 0.0
        %v2207 = vmax.f32 %v2115, 0.0
        %v2208 = vmax.f32 %v2164, 0.0
        %v2209 = vmax.f32 %v2020, 0.0
        %v2210 = vmax.f32 %v2069, 0.0
        %v2211 = vmax.f32 %v2118, 0.0
        %v2212 = vmax.f32 %v2167, 0.0
        %v2213 = vmax.f32 %v2022, 0.0
        %v2214 = vmax.f32 %v2071, 0.0
        %v2215 = vmax.f32 %v2120, 0.0
        %v2216 = vmax.f32 %v2169, 0.0
        %v2217 = vmax.f32 %v2025, 0.0
        %v2218 = vmax.f32 %v2074, 0.0
        %v2219 = vmax.f32 %v2123, 0.0
        %v2220 = vmax.f32 %v2172, 0.0
        %v2221 = vmax.f32 %v2027, 0.0
        %v2222 = vmax.f32 %v2076, 0.0
        %v2223 = vmax.f32 %v2125, 0.0
        %v2224 = vmax.f32 %v2174, 0.0
        %v2225 = vmax.f32 %v2030, 0.0
        %v2226 = vmax.f32 %v2079, 0.0
        %v2227 = vmax.f32 %v2128, 0.0
        %v2228 = vmax.f32 %v2177, 0.0
        %v2229 = vmax.f32 %v2032, 0.0
        %v2230 = vmax.f32 %v2081, 0.0
        %v2231 = vmax.f32 %v2130, 0.0
        %v2232 = vmax.f32 %v2179, 0.0
        %v2233 = vmax.f32 %v2035, 0.0
        %v2234 = vmax.f32 %v2084, 0.0
        %v2235 = vmax.f32 %v2133, 0.0
        %v2236 = vmax.f32 %v2182, 0.0
        %v2237 = vmax.f32 %v2037, 0.0
        %v2238 = vmax.f32 %v2086, 0.0
        %v2239 = vmax.f32 %v2135, 0.0
        %v2240 = vmax.f32 %v2184, 0.0
        %v2241 = vmax.f32 %v2040, 0.0
        %v2242 = vmax.f32 %v2089, 0.0
        %v2243 = vmax.f32 %v2138, 0.0
        %v2244 = vmax.f32 %v2187, 0.0
        %v2245 = vmax.f32 %v2042, 0.0
        %v2246 = vmax.f32 %v2091, 0.0
        %v2247 = vmax.f32 %v2140, 0.0
        %v2248 = vmax.f32 %v2189, 0.0
        %v2249 = vmax.f32 %v2045, 0.0
        %v2250 = vmax.f32 %v2094, 0.0
        %v2251 = vmax.f32 %v2143, 0.0
        %v2252 = vmax.f32 %v2192, 0.0
        %v2253 = vmax.f32 %v2047, 0.0
        %v2254 = vmax.f32 %v2096, 0.0
        %v2255 = vmax.f32 %v2145, 0.0
        %v2256 = vmax.f32 %v2194, 0.0
        %v2257 = vmax.f32 %v2050, 0.0
        %v2258 = vmax.f32 %v2099, 0.0
        %v2259 = vmax.f32 %v2148, 0.0
        %v2260 = vmax.f32 %v2197, 0.0
        %v2261 = vmax.f32 %v2052, 0.0
        %v2262 = vmax.f32 %v2101, 0.0
        %v2263 = vmax.f32 %v2150, 0.0
        %v2264 = vmax.f32 %v2199, 0.0
        %v2265 = vpack.c.bf16 %v2205, %v2201
        %v2266 = vpack.c.bf16 %v2206, %v2202
        %v2267 = vpack.c.bf16 %v2207, %v2203
        %v2268 = vpack.c.bf16 %v2208, %v2204
        %v2269 = vpack.c.bf16 %v2213, %v2209
        %v2270 = vpack.c.bf16 %v2214, %v2210
        %v2271 = vpack.c.bf16 %v2215, %v2211
        %v2272 = vpack.c.bf16 %v2216, %v2212
        %v2273 = vpack.c.bf16 %v2221, %v2217
        %v2274 = vpack.c.bf16 %v2222, %v2218
        %v2275 = vpack.c.bf16 %v2223, %v2219
        %v2276 = vpack.c.bf16 %v2224, %v2220
        %v2277 = vpack.c.bf16 %v2229, %v2225
        %v2278 = vpack.c.bf16 %v2230, %v2226
        %v2279 = vpack.c.bf16 %v2231, %v2227
        %v2280 = vpack.c.bf16 %v2232, %v2228
        %v2281 = vpack.c.bf16 %v2237, %v2233
        %v2282 = vpack.c.bf16 %v2238, %v2234
        %v2283 = vpack.c.bf16 %v2239, %v2235
        %v2284 = vpack.c.bf16 %v2240, %v2236
        %v2285 = vpack.c.bf16 %v2245, %v2241
        %v2286 = vpack.c.bf16 %v2246, %v2242
        %v2287 = vpack.c.bf16 %v2247, %v2243
        %v2288 = vpack.c.bf16 %v2248, %v2244
        %v2289 = vpack.c.bf16 %v2253, %v2249
        %v2290 = vpack.c.bf16 %v2254, %v2250
        %v2291 = vpack.c.bf16 %v2255, %v2251
        %v2292 = vpack.c.bf16 %v2256, %v2252
        %v2293 = vpack.c.bf16 %v2261, %v2257
        %v2294 = vpack.c.bf16 %v2262, %v2258
        %v2295 = vpack.c.bf16 %v2263, %v2259
        %v2296 = vpack.c.bf16 %v2264, %v2260
        %v2297 = vld [vmem:[%s9] sm:$0xf]
        %v2298 = vld [vmem:[%s10] sm:$0xff]
        %2300 = vset.pattern.permute.xlu0 0
        %2301 = vperm.xlu0 %2300, %v2298
        %v2302 = vpop.permute.xlu0 %2301
        %2304 = vmatpush.bf16.msra.mxu0 %v2293
        %2305 = vmatpush.bf16.msra.mxu0 %v2289
        %2306 = vmatpush.bf16.msra.mxu0 %v2285
        %2307 = vmatpush.bf16.msra.mxu0 %v2281
        %2308 = vmatpush.bf16.msra.mxu0 %v2277
        %2309 = vmatpush.bf16.msra.mxu0 %v2273
        %2310 = vmatpush.bf16.msra.mxu0 %v2269
        %2311 = vmatpush.bf16.msra.mxu0 %v2265
        %2312 = vmatmul.bf16.gmra.mxu0 %v2297
        %v2313 = vpop.f32.mrf.mxu0
        %v2314 = vadd.f32 %v2302, %v2313
        %v2315 = vpop.f32.mrf.mxu0
        %2316 = vdwg.mxu0
        %2317 = vmatpush.bf16.msra.mxu0 %v2294
        %2318 = vmatpush.bf16.msra.mxu0 %v2290
        %2319 = vmatpush.bf16.msra.mxu0 %v2286
        %2320 = vmatpush.bf16.msra.mxu0 %v2282
        %2321 = vmatpush.bf16.msra.mxu0 %v2278
        %2322 = vmatpush.bf16.msra.mxu0 %v2274
        %2323 = vmatpush.bf16.msra.mxu0 %v2270
        %2324 = vmatpush.bf16.msra.mxu0 %v2266
        %2325 = vmatmul.bf16.gmra.mxu0 %v2297
        %v2326 = vpop.f32.mrf.mxu0
        %v2327 = vadd.f32 %v2302, %v2326
        %v2328 = vpop.f32.mrf.mxu0
        %2329 = vdwg.mxu0
        %2330 = vmatpush.bf16.msra.mxu0 %v2295
        %2331 = vmatpush.bf16.msra.mxu0 %v2291
        %2332 = vmatpush.bf16.msra.mxu0 %v2287
        %2333 = vmatpush.bf16.msra.mxu0 %v2283
        %2334 = vmatpush.bf16.msra.mxu0 %v2279
        %2335 = vmatpush.bf16.msra.mxu0 %v2275
        %2336 = vmatpush.bf16.msra.mxu0 %v2271
        %2337 = vmatpush.bf16.msra.mxu0 %v2267
        %2338 = vmatmul.bf16.gmra.mxu0 %v2297
        %v2339 = vpop.f32.mrf.mxu0
        %v2340 = vadd.f32 %v2302, %v2339
        %v2341 = vpop.f32.mrf.mxu0
        %2342 = vdwg.mxu0
        %2343 = vmatpush.bf16.msra.mxu0 %v2296
        %2344 = vmatpush.bf16.msra.mxu0 %v2292
        %2345 = vmatpush.bf16.msra.mxu0 %v2288
        %2346 = vmatpush.bf16.msra.mxu0 %v2284
        %2347 = vmatpush.bf16.msra.mxu0 %v2280
        %2348 = vmatpush.bf16.msra.mxu0 %v2276
        %2349 = vmatpush.bf16.msra.mxu0 %v2272
        %2350 = vmatpush.bf16.msra.mxu0 %v2268
        %2351 = vmatmul.bf16.gmra.mxu0 %v2297
        %v2352 = vpop.f32.mrf.mxu0
        %v2353 = vadd.f32 %v2302, %v2352
        %v2354 = vpop.f32.mrf.mxu0
        %2355 = vdwg.mxu0
        %2356 = vst [vmem:[%s421] sm:$0xff] %v2314
        %2357 = vst [vmem:[%s421 + $0x8] sm:$0xff] %v2327
        %2358 = vst [vmem:[%s421 + $0x10] sm:$0xff] %v2340
        %2359 = vst [vmem:[%s421 + $0x18] sm:$0xff] %v2353
        %s2360 = smul.u32 4, %s22
        %p2361 = scmp.lt.s32.totalorder %s2360, 7
        %s2362 = scalar_select %p2361, %s2360, 7
        %s2363 = smul.addr %s2362, 8
        %s2364 = scalar_lea.vmem %s11, %s2363
        // Predicated region
        $region88: #{hashencoding_sdf_forward.1} parent=82 // pred_check
          %p2365 = pneg %p276
        $region89: #{hashencoding_sdf_forward.1} parent=82 // pred_check_branch
          %2367 = sbr.rel (%p2365) target = $region91
        $region90: #{hashencoding_sdf_forward.1} parent=82 // pred_region
          %s2368 = smul.u32 4, %s22
        $region91: #{hashencoding_sdf_forward.1} parent=82 // pred_fallthru
          _
      $region83: #{hashencoding_sdf_forward.1} parent=5 // pred_fallthru
        _
      %p2369 = scmp.le.s32.totalorder 2, %s17
      // Predicated region
      $region92: #{hashencoding_sdf_forward.1} parent=5 // pred_check
        %p2370 = pneg %p2369
      $region93: #{hashencoding_sdf_forward.1} parent=5 // pred_check_branch
        %2372 = sbr.rel (%p2370) target = $region95
      $region94: #{hashencoding_sdf_forward.1} parent=5 // pred_region
        %s2373 = ssub.s32 %s17, 2
        // Predicated region
        $region96: #{hashencoding_sdf_forward.1} parent=94 // pred_check
          %p2374 = pneg %p282
        $region97: #{hashencoding_sdf_forward.1} parent=94 // pred_check_branch
          %2376 = sbr.rel (%p2374) target = $region99
        $region98: #{hashencoding_sdf_forward.1} parent=94 // pred_region
          %s2377 = smul.u32 4, %s23
          %p2378 = scmp.lt.s32.totalorder %s2377, 7
          %s2379 = scalar_select %p2378, %s2377, 7
          %s2380 = smul.addr %s2379, 8
          %s2381 = scalar_lea.vmem %s11, %s2380
        $region99: #{hashencoding_sdf_forward.1} parent=94 // pred_fallthru
          _
      $region95: #{hashencoding_sdf_forward.1} parent=5 // pred_fallthru
        _
    $region6: #{hashencoding_sdf_forward.1} parent=1 // loop_footer
      %s21 = sadd.s32 1, %s17
    $region7: #{hashencoding_sdf_forward.1} parent=1 // loop_footer_branch
      %16 = sbr.rel target = $region3
    $region8: #{hashencoding_sdf_forward.1} parent=1 // loop_exit
      _

</llo_original>
